<compile_context>
chip_gen: v7x
topology: tpu7x:2x2x1
jax: 0.10.0
libtpu: 0.0.40
codegen_flags: <defaults>
</compile_context>

<pallas_src>
import functools

import jax
import jax.numpy as jnp
from jax.experimental import pallas as pl
from jax.experimental.pallas import tpu as pltpu

LANES = 128


def _conv_bn_swish_kernel(x_ref, w_ref, scale_ref, shift_ref, o_ref, *,
                          KH, KW, tile_h, out_w, cin, approx_silu):
    # x_ref:     (tile_h + KH - 1, W_pad, Cin)   halo row window of this tile
    # w_ref:     (KH*KW*Cin, Cout_p)             im2col-ordered conv weights
    # scale_ref: (1, Cout_p) f32                 gamma / sqrt(var + eps)
    # shift_ref: (1, Cout_p) f32                 beta - mean * scale
    # o_ref:     (tile_h*out_w, Cout_p)          flattened lane-dense output tile
    slab = x_ref[...]                                    # load the slab once

    # Build the (M, KH*KW*Cin) im2col patch in registers (no scratch round-trip);
    # column order (kh, kw, cin) matches w_ref's row order.
    taps = []
    for kh in range(KH):
        rows = slab[kh:kh + tile_h]                      # (tile_h, W_pad, Cin)
        for kw in range(KW):
            taps.append(rows[:, kw:kw + out_w, :].reshape(tile_h * out_w, cin))
    patch = jnp.concatenate(taps, axis=-1)               # (M, KH*KW*Cin)

    # Single MXU GEMM, native (bf16/f32) inputs, f32 accumulation.
    acc = jnp.dot(patch, w_ref[...], preferred_element_type=jnp.float32)

    # Fused BN (eval-mode affine) + swish epilogue in f32.
    y = acc * scale_ref[...] + shift_ref[...]
    y = y * pl.reciprocal(1.0 + jnp.exp(-y), approx=approx_silu)   # x * sigmoid(x)
    o_ref[...] = y.astype(o_ref.dtype)


def _vmem_capacity_bytes():
    """Chip VMEM capacity (64 MiB v7x, 128 MiB v5e/v6e); conservative fallback."""
    try:
        info = pltpu.get_tpu_info()
        for name in ("vmem_capacity_bytes", "vmem_size_bytes", "vmem_bytes"):
            cap = getattr(info, name, None)
            if cap:
                return int(cap)
    except Exception:
        pass
    return 64 * 1024 * 1024


def _pick_tile_h(H, W, W_pad, cin, kk_cin, cout_p, pad_h, in_item, out_item,
                 budget, requested=None):
    """Largest divisor of H whose full per-step VMEM footprint fits `budget`,
    preferring M = tile_h*W that is a multiple of 128 (then 8)."""

    def footprint(th):
        m = th * W
        halo = th + 2 * pad_h
        return (2 * halo * W_pad * cin * in_item        # input slab, double-buffered
                + 2 * kk_cin * cout_p * in_item         # weights (worst case 2 bufs)
                + 2 * m * cout_p * out_item             # output tile, double-buffered
                + 2 * m * kk_cin * in_item              # patch + concat temporaries
                + 2 * m * cout_p * 4)                   # f32 accumulator + epilogue

    if requested is not None and H % requested == 0 and footprint(requested) <= budget:
        return requested
    divisors = [d for d in range(1, H + 1) if H % d == 0]
    fits = [d for d in divisors if footprint(d) <= budget]
    if not fits:
        return 1                                         # degrade gracefully
    for align in (128, 8, 1):
        good = [d for d in fits if (d * W) % align == 0]
        if good:
            return max(good)
    return max(fits)


def conv_layer_forward(x_nchw, weight_oihw, gamma, beta, running_mean,
                       running_var, eps=1e-5, *, stride=1, dilation=1, groups=1,
                       tile_h=None, compute_dtype=jnp.bfloat16, approx_silu=True):
    """ConvLayer.forward: conv(KxK, s=1, same-pad, bias=False) + BN(eval) + Swish."""
    N, Cin, H, W = x_nchw.shape
    Cout, Cin_w, KH, KW = weight_oihw.shape
    # Fail loudly for configurations the kernel does not lower.
    assert stride == 1 and dilation == 1 and groups == 1, \
        "Only the default ConvLayer path (stride=1, dilation=1, groups=1) is implemented"
    assert KH % 2 == 1 and KW % 2 == 1, "even kernel sizes not implemented"
    assert Cin_w == Cin, "groups != 1 path not implemented"

    pad_h, pad_w = (KH - 1) // 2, (KW - 1) // 2
    W_pad = W + 2 * pad_w
    kk_cin = KH * KW * Cin
    cout_p = ((Cout + LANES - 1) // LANES) * LANES       # lane-dense output channels
    out_dtype = x_nchw.dtype
    compute_dtype = jnp.dtype(compute_dtype if compute_dtype is not None
                              else x_nchw.dtype)
    in_item = compute_dtype.itemsize
    out_item = jnp.dtype(out_dtype).itemsize

    vmem_cap = _vmem_capacity_bytes()
    vmem_limit = min(int(vmem_cap * 0.75), 100 * 1024 * 1024)   # 48 MiB v7x / 96 MiB v5e,v6e
    tile_h = _pick_tile_h(H, W, W_pad, Cin, kk_cin, cout_p, pad_h, in_item,
                          out_item, budget=int(vmem_limit * 0.8), requested=tile_h)
    T = H // tile_h
    halo_h = tile_h + 2 * pad_h

    # NCHW -> NHWC, 'same' zero pad, then gather overlapping halo row windows so
    # every grid step's input block is a uniform (halo_h, W_pad, Cin) slab.
    x_nhwc = jnp.transpose(x_nchw, (0, 2, 3, 1)).astype(compute_dtype)
    x_padded = jnp.pad(x_nhwc, ((0, 0), (pad_h, pad_h), (pad_w, pad_w), (0, 0)))
    row_idx = (jnp.arange(T) * tile_h)[:, None] + jnp.arange(halo_h)[None, :]
    x_halo = x_padded[:, row_idx]                        # (N, T, halo_h, W_pad, Cin)

    # Weights: OIHW -> (KH, KW, Cin, Cout) -> (KH*KW*Cin, Cout_p), matching the
    # in-kernel patch column order (kh, kw, cin).
    w2d = jnp.transpose(weight_oihw, (2, 3, 1, 0)).reshape(kk_cin, Cout)
    w2d = jnp.pad(w2d, ((0, 0), (0, cout_p - Cout))).astype(compute_dtype)

    # Fold BN (eval mode) to per-channel scale/shift (f32), lane-padded with zeros
    # so padded Cout channels stay exactly zero.
    scale = gamma / jnp.sqrt(running_var + eps)
    shift = beta - running_mean * scale
    scale_p = jnp.pad(scale, (0, cout_p - Cout)).reshape(1, cout_p).astype(jnp.float32)
    shift_p = jnp.pad(shift, (0, cout_p - Cout)).reshape(1, cout_p).astype(jnp.float32)

    kernel = functools.partial(_conv_bn_swish_kernel, KH=KH, KW=KW, tile_h=tile_h,
                               out_w=W, cin=Cin, approx_silu=approx_silu)

    def _const_spec(shape, imap, single_buffer):
        # Grid-invariant operands: single-buffer them when the jax version supports it.
        if single_buffer and hasattr(pl, "Buffered"):
            try:
                return pl.BlockSpec(shape, imap, pipeline_mode=pl.Buffered(1))
            except TypeError:
                pass
        return pl.BlockSpec(shape, imap)

    def _run(single_buffer_consts):
        return pl.pallas_call(
            kernel,
            out_shape=jax.ShapeDtypeStruct((N, T, tile_h * W, cout_p), out_dtype),
            grid=(N, T),
            in_specs=[
                pl.BlockSpec((None, None, halo_h, W_pad, Cin),
                             lambda n, t: (n, t, 0, 0, 0)),
                _const_spec((kk_cin, cout_p), lambda n, t: (0, 0), single_buffer_consts),
                _const_spec((1, cout_p), lambda n, t: (0, 0), single_buffer_consts),
                _const_spec((1, cout_p), lambda n, t: (0, 0), single_buffer_consts),
            ],
            out_specs=pl.BlockSpec((None, None, tile_h * W, cout_p),
                                   lambda n, t: (n, t, 0, 0)),
            compiler_params=pltpu.CompilerParams(
                dimension_semantics=("parallel", "parallel"),
                vmem_limit_bytes=vmem_limit),
        )(x_halo, w2d, scale_p, shift_p)

    try:
        out_flat = _run(True)
    except Exception:            # jax versions without Buffered(1) single-buffering
        out_flat = _run(False)

    out = out_flat.reshape(N, H, W, cout_p)[..., :Cout]   # drop channel padding
    return jnp.transpose(out, (0, 3, 1, 2))               # back to NCHW


def _reference_forward(x_nchw, weight_oihw, gamma, beta, running_mean,
                       running_var, eps=1e-5):
    """Pure-JAX reference (lax conv) for correctness check."""
    y = jax.lax.conv_general_dilated(
        x_nchw, weight_oihw, window_strides=(1, 1), padding="SAME",
        dimension_numbers=("NCHW", "OIHW", "NCHW"))
    scale = (gamma / jnp.sqrt(running_var + eps)).reshape(1, -1, 1, 1)
    shift = (beta - running_mean * gamma / jnp.sqrt(running_var + eps)
             ).reshape(1, -1, 1, 1)
    y = y * scale + shift
    return y * jax.nn.sigmoid(y)


if __name__ == "__main__":
    key = jax.random.PRNGKey(0)
    k_x, k_w, k_g, k_b, k_m, k_v = jax.random.split(key, 6)

    N, Cin, H, W = 2, 4, 16, 16
    Cout, KH, KW = 8, 3, 3

    x = jax.random.normal(k_x, (N, Cin, H, W), dtype=jnp.float32)
    weight = jax.random.normal(k_w, (Cout, Cin, KH, KW), dtype=jnp.float32) * 0.1
    gamma = 1.0 + 0.1 * jax.random.normal(k_g, (Cout,), dtype=jnp.float32)
    beta = 0.1 * jax.random.normal(k_b, (Cout,), dtype=jnp.float32)
    running_mean = 0.1 * jax.random.normal(k_m, (Cout,), dtype=jnp.float32)
    running_var = jnp.abs(jax.random.normal(k_v, (Cout,), dtype=jnp.float32)) + 0.5

    ref = _reference_forward(x, weight, gamma, beta, running_mean, running_var)

    # Strict-numerics path (f32 MXU + exact sigmoid); tile_h=8 -> grid (2, 2)
    # exercises the multi-tile halo-window pipelined path.
    out_f32 = conv_layer_forward(x, weight, gamma, beta, running_mean, running_var,
                                 tile_h=8, compute_dtype=jnp.float32,
                                 approx_silu=False)
    out_f32 = jax.block_until_ready(out_f32)
    assert out_f32.shape == (N, Cout, H, W)
    assert jnp.allclose(out_f32, ref, atol=1e-4, rtol=1e-4)

    # Default performance path (bf16 into the MXU + approx-reciprocal swish).
    out_bf16 = conv_layer_forward(x, weight, gamma, beta, running_mean, running_var,
                                  tile_h=8)
    out_bf16 = jax.block_until_ready(out_bf16)
    assert out_bf16.shape == (N, Cout, H, W)
    assert jnp.allclose(out_bf16, ref, atol=5e-2, rtol=5e-2)

    print("KERNEL_OK")
</pallas_src>

<mosaic_0001>
module attributes {stable_mosaic.version = 11 : i64} {
  func.func @_conv_bn_swish_kernel(%arg0: i32, %arg1: i32, %arg2: memref<1x1x10x18x4xf32, #tpu.memory_space<vmem>>, %arg3: memref<36x128xf32, #tpu.memory_space<vmem>>, %arg4: memref<1x128xf32, #tpu.memory_space<vmem>>, %arg5: memref<1x128xf32, #tpu.memory_space<vmem>>, %arg6: memref<1x1x128x128xf32, #tpu.memory_space<vmem>>) attributes {dimension_semantics = [#tpu.dimension_semantics<parallel>, #tpu.dimension_semantics<parallel>], iteration_bounds = array<i64: 2, 2>, scalar_prefetch = 0 : i64, scratch_operands = 0 : i64, tpu.core_type = #tpu.core_type<tc>, window_params = [{transform_indices = @transform_0, window_bounds = array<i64: 1, 1, 10, 18, 4>}, {pipeline_mode = #tpu.pipeline_mode<synchronous>, transform_indices = @transform_1, window_bounds = array<i64: 36, 128>}, {pipeline_mode = #tpu.pipeline_mode<synchronous>, transform_indices = @transform_2, window_bounds = array<i64: 1, 128>}, {pipeline_mode = #tpu.pipeline_mode<synchronous>, transform_indices = @transform_3, window_bounds = array<i64: 1, 128>}, {transform_indices = @transform_4, window_bounds = array<i64: 1, 1, 128, 128>}]} {
    %c0 = arith.constant 0 : index
    %c0_0 = arith.constant 0 : index
    %c0_1 = arith.constant 0 : index
    %c0_2 = arith.constant 0 : index
    %c0_3 = arith.constant 0 : index
    %0 = vector.load %arg2[%c0, %c0_0, %c0_1, %c0_2, %c0_3] : memref<1x1x10x18x4xf32, #tpu.memory_space<vmem>>, vector<1x1x10x18x4xf32>
    %1 = vector.shape_cast %0 : vector<1x1x10x18x4xf32> to vector<10x18x4xf32>
    %2 = vector.extract_strided_slice %1 {offsets = [0, 0, 0], sizes = [8, 18, 4], strides = [1, 1, 1]} : vector<10x18x4xf32> to vector<8x18x4xf32>
    %3 = vector.extract_strided_slice %2 {offsets = [0, 0, 0], sizes = [8, 16, 4], strides = [1, 1, 1]} : vector<8x18x4xf32> to vector<8x16x4xf32>
    %4 = vector.shape_cast %3 : vector<8x16x4xf32> to vector<128x4xf32>
    %5 = vector.extract_strided_slice %2 {offsets = [0, 1, 0], sizes = [8, 16, 4], strides = [1, 1, 1]} : vector<8x18x4xf32> to vector<8x16x4xf32>
    %6 = vector.shape_cast %5 : vector<8x16x4xf32> to vector<128x4xf32>
    %7 = vector.extract_strided_slice %2 {offsets = [0, 2, 0], sizes = [8, 16, 4], strides = [1, 1, 1]} : vector<8x18x4xf32> to vector<8x16x4xf32>
    %8 = vector.shape_cast %7 : vector<8x16x4xf32> to vector<128x4xf32>
    %9 = vector.extract_strided_slice %1 {offsets = [1, 0, 0], sizes = [8, 18, 4], strides = [1, 1, 1]} : vector<10x18x4xf32> to vector<8x18x4xf32>
    %10 = vector.extract_strided_slice %9 {offsets = [0, 0, 0], sizes = [8, 16, 4], strides = [1, 1, 1]} : vector<8x18x4xf32> to vector<8x16x4xf32>
    %11 = vector.shape_cast %10 : vector<8x16x4xf32> to vector<128x4xf32>
    %12 = vector.extract_strided_slice %9 {offsets = [0, 1, 0], sizes = [8, 16, 4], strides = [1, 1, 1]} : vector<8x18x4xf32> to vector<8x16x4xf32>
    %13 = vector.shape_cast %12 : vector<8x16x4xf32> to vector<128x4xf32>
    %14 = vector.extract_strided_slice %9 {offsets = [0, 2, 0], sizes = [8, 16, 4], strides = [1, 1, 1]} : vector<8x18x4xf32> to vector<8x16x4xf32>
    %15 = vector.shape_cast %14 : vector<8x16x4xf32> to vector<128x4xf32>
    %16 = vector.extract_strided_slice %1 {offsets = [2, 0, 0], sizes = [8, 18, 4], strides = [1, 1, 1]} : vector<10x18x4xf32> to vector<8x18x4xf32>
    %17 = vector.extract_strided_slice %16 {offsets = [0, 0, 0], sizes = [8, 16, 4], strides = [1, 1, 1]} : vector<8x18x4xf32> to vector<8x16x4xf32>
    %18 = vector.shape_cast %17 : vector<8x16x4xf32> to vector<128x4xf32>
    %19 = vector.extract_strided_slice %16 {offsets = [0, 1, 0], sizes = [8, 16, 4], strides = [1, 1, 1]} : vector<8x18x4xf32> to vector<8x16x4xf32>
    %20 = vector.shape_cast %19 : vector<8x16x4xf32> to vector<128x4xf32>
    %21 = vector.extract_strided_slice %16 {offsets = [0, 2, 0], sizes = [8, 16, 4], strides = [1, 1, 1]} : vector<8x18x4xf32> to vector<8x16x4xf32>
    %22 = vector.shape_cast %21 : vector<8x16x4xf32> to vector<128x4xf32>
    %23 = tpu.concatenate %4, %6, %8, %11, %13, %15, %18, %20, %22 in 1 : vector<128x4xf32>, vector<128x4xf32>, vector<128x4xf32>, vector<128x4xf32>, vector<128x4xf32>, vector<128x4xf32>, vector<128x4xf32>, vector<128x4xf32>, vector<128x4xf32> -> vector<128x36xf32>
    %c0_4 = arith.constant 0 : index
    %c0_5 = arith.constant 0 : index
    %24 = vector.load %arg3[%c0_4, %c0_5] : memref<36x128xf32, #tpu.memory_space<vmem>>, vector<36x128xf32>
    %cst = arith.constant dense<0.000000e+00> : vector<128x128xf32>
    %25 = tpu.matmul %23, %24, %cst {dimension_numbers = #tpu.dot_dimension_numbers<[1], [0], [0], [1], [0, 0, 1, 1], [], []>} : vector<128x36xf32>, vector<36x128xf32>, vector<128x128xf32> -> vector<128x128xf32>
    %c0_6 = arith.constant 0 : index
    %c0_7 = arith.constant 0 : index
    %26 = vector.load %arg4[%c0_6, %c0_7] : memref<1x128xf32, #tpu.memory_space<vmem>>, vector<1x128xf32>
    %27 = vector.broadcast %26 : vector<1x128xf32> to vector<128x128xf32>
    %28 = arith.mulf %25, %27 : vector<128x128xf32>
    %c0_8 = arith.constant 0 : index
    %c0_9 = arith.constant 0 : index
    %29 = vector.load %arg5[%c0_8, %c0_9] : memref<1x128xf32, #tpu.memory_space<vmem>>, vector<1x128xf32>
    %30 = vector.broadcast %29 : vector<1x128xf32> to vector<128x128xf32>
    %31 = arith.addf %28, %30 : vector<128x128xf32>
    %cst_10 = arith.constant 0.000000e+00 : f32
    %32 = vector.broadcast %cst_10 : f32 to vector<128x128xf32>
    %33 = arith.subf %32, %31 : vector<128x128xf32>
    %34 = math.exp %33 : vector<128x128xf32>
    %cst_11 = arith.constant 1.000000e+00 : f32
    %35 = vector.broadcast %cst_11 : f32 to vector<128x128xf32>
    %36 = arith.addf %35, %34 : vector<128x128xf32>
    %37 = tpu.reciprocal %36 : vector<128x128xf32> -> vector<128x128xf32>
    %38 = arith.mulf %31, %37 : vector<128x128xf32>
    %c0_12 = arith.constant 0 : index
    %c0_13 = arith.constant 0 : index
    %c0_14 = arith.constant 0 : index
    %c0_15 = arith.constant 0 : index
    %39 = vector.load %arg6[%c0_12, %c0_13, %c0_14, %c0_15] : memref<1x1x128x128xf32, #tpu.memory_space<vmem>>, vector<1x1x128x128xf32>
    %40 = vector.shape_cast %39 : vector<1x1x128x128xf32> to vector<128x128xf32>
    %41 = vector.shape_cast %38 : vector<128x128xf32> to vector<1x1x128x128xf32>
    tpu.vector_store %arg6[%c0_12, %c0_13, %c0_14, %c0_15], %41 {strides = array<i32>} : memref<1x1x128x128xf32, #tpu.memory_space<vmem>>, vector<1x1x128x128xf32>,
    return
  }
  func.func @transform_0(%arg0: i32, %arg1: i32) -> (i32, i32, i32, i32, i32) {
    %c0_i32 = arith.constant 0 : i32
    %c0_i32_0 = arith.constant 0 : i32
    %c0_i32_1 = arith.constant 0 : i32
    %c0_i32_2 = arith.constant 0 : i32
    return %arg0, %arg1, %c0_i32, %c0_i32_0, %c0_i32_1 : i32, i32, i32, i32, i32
  }
  func.func @transform_1(%arg0: i32, %arg1: i32) -> (i32, i32) {
    %c0_i32 = arith.constant 0 : i32
    %c0_i32_0 = arith.constant 0 : i32
    %c0_i32_1 = arith.constant 0 : i32
    return %c0_i32, %c0_i32_0 : i32, i32
  }
  func.func @transform_2(%arg0: i32, %arg1: i32) -> (i32, i32) {
    %c0_i32 = arith.constant 0 : i32
    %c0_i32_0 = arith.constant 0 : i32
    %c0_i32_1 = arith.constant 0 : i32
    return %c0_i32, %c0_i32_0 : i32, i32
  }
  func.func @transform_3(%arg0: i32, %arg1: i32) -> (i32, i32) {
    %c0_i32 = arith.constant 0 : i32
    %c0_i32_0 = arith.constant 0 : i32
    %c0_i32_1 = arith.constant 0 : i32
    return %c0_i32, %c0_i32_0 : i32, i32
  }
  func.func @transform_4(%arg0: i32, %arg1: i32) -> (i32, i32, i32, i32) {
    %c0_i32 = arith.constant 0 : i32
    %c0_i32_0 = arith.constant 0 : i32
    %c0_i32_1 = arith.constant 0 : i32
    return %arg0, %arg1, %c0_i32, %c0_i32_0 : i32, i32, i32, i32
  }
}

module attributes {stable_mosaic.version = 11 : i64} {
  func.func @_conv_bn_swish_kernel(%arg0: i32, %arg1: i32, %arg2: memref<1x1x10x18x4xf32, #tpu.memory_space<vmem>>, %arg3: memref<36x128xf32, #tpu.memory_space<vmem>>, %arg4: memref<1x128xf32, #tpu.memory_space<vmem>>, %arg5: memref<1x128xf32, #tpu.memory_space<vmem>>, %arg6: memref<1x1x128x128xf32, #tpu.memory_space<vmem>>) attributes {dimension_semantics = [#tpu.dimension_semantics<parallel>, #tpu.dimension_semantics<parallel>], iteration_bounds = array<i64: 2, 2>, scalar_prefetch = 0 : i64, scratch_operands = 0 : i64, tpu.core_type = #tpu.core_type<tc>, window_params = [{transform_indices = @transform_0, window_bounds = array<i64: 1, 1, 10, 18, 4>}, {pipeline_mode = #tpu.pipeline_mode<synchronous>, transform_indices = @transform_1, window_bounds = array<i64: 36, 128>}, {pipeline_mode = #tpu.pipeline_mode<synchronous>, transform_indices = @transform_2, window_bounds = array<i64: 1, 128>}, {pipeline_mode = #tpu.pipeline_mode<synchronous>, transform_indices = @transform_3, window_bounds = array<i64: 1, 128>}, {transform_indices = @transform_4, window_bounds = array<i64: 1, 1, 128, 128>}]} {
    %c0 = arith.constant 0 : index
    %c0_0 = arith.constant 0 : index
    %c0_1 = arith.constant 0 : index
    %c0_2 = arith.constant 0 : index
    %c0_3 = arith.constant 0 : index
    %0 = vector.load %arg2[%c0, %c0_0, %c0_1, %c0_2, %c0_3] : memref<1x1x10x18x4xf32, #tpu.memory_space<vmem>>, vector<1x1x10x18x4xf32>
    %1 = vector.shape_cast %0 : vector<1x1x10x18x4xf32> to vector<10x18x4xf32>
    %2 = vector.extract_strided_slice %1 {offsets = [0, 0, 0], sizes = [8, 18, 4], strides = [1, 1, 1]} : vector<10x18x4xf32> to vector<8x18x4xf32>
    %3 = vector.extract_strided_slice %2 {offsets = [0, 0, 0], sizes = [8, 16, 4], strides = [1, 1, 1]} : vector<8x18x4xf32> to vector<8x16x4xf32>
    %4 = vector.shape_cast %3 : vector<8x16x4xf32> to vector<128x4xf32>
    %5 = vector.extract_strided_slice %2 {offsets = [0, 1, 0], sizes = [8, 16, 4], strides = [1, 1, 1]} : vector<8x18x4xf32> to vector<8x16x4xf32>
    %6 = vector.shape_cast %5 : vector<8x16x4xf32> to vector<128x4xf32>
    %7 = vector.extract_strided_slice %2 {offsets = [0, 2, 0], sizes = [8, 16, 4], strides = [1, 1, 1]} : vector<8x18x4xf32> to vector<8x16x4xf32>
    %8 = vector.shape_cast %7 : vector<8x16x4xf32> to vector<128x4xf32>
    %9 = vector.extract_strided_slice %1 {offsets = [1, 0, 0], sizes = [8, 18, 4], strides = [1, 1, 1]} : vector<10x18x4xf32> to vector<8x18x4xf32>
    %10 = vector.extract_strided_slice %9 {offsets = [0, 0, 0], sizes = [8, 16, 4], strides = [1, 1, 1]} : vector<8x18x4xf32> to vector<8x16x4xf32>
    %11 = vector.shape_cast %10 : vector<8x16x4xf32> to vector<128x4xf32>
    %12 = vector.extract_strided_slice %9 {offsets = [0, 1, 0], sizes = [8, 16, 4], strides = [1, 1, 1]} : vector<8x18x4xf32> to vector<8x16x4xf32>
    %13 = vector.shape_cast %12 : vector<8x16x4xf32> to vector<128x4xf32>
    %14 = vector.extract_strided_slice %9 {offsets = [0, 2, 0], sizes = [8, 16, 4], strides = [1, 1, 1]} : vector<8x18x4xf32> to vector<8x16x4xf32>
    %15 = vector.shape_cast %14 : vector<8x16x4xf32> to vector<128x4xf32>
    %16 = vector.extract_strided_slice %1 {offsets = [2, 0, 0], sizes = [8, 18, 4], strides = [1, 1, 1]} : vector<10x18x4xf32> to vector<8x18x4xf32>
    %17 = vector.extract_strided_slice %16 {offsets = [0, 0, 0], sizes = [8, 16, 4], strides = [1, 1, 1]} : vector<8x18x4xf32> to vector<8x16x4xf32>
    %18 = vector.shape_cast %17 : vector<8x16x4xf32> to vector<128x4xf32>
    %19 = vector.extract_strided_slice %16 {offsets = [0, 1, 0], sizes = [8, 16, 4], strides = [1, 1, 1]} : vector<8x18x4xf32> to vector<8x16x4xf32>
    %20 = vector.shape_cast %19 : vector<8x16x4xf32> to vector<128x4xf32>
    %21 = vector.extract_strided_slice %16 {offsets = [0, 2, 0], sizes = [8, 16, 4], strides = [1, 1, 1]} : vector<8x18x4xf32> to vector<8x16x4xf32>
    %22 = vector.shape_cast %21 : vector<8x16x4xf32> to vector<128x4xf32>
    %23 = tpu.concatenate %4, %6, %8, %11, %13, %15, %18, %20, %22 in 1 : vector<128x4xf32>, vector<128x4xf32>, vector<128x4xf32>, vector<128x4xf32>, vector<128x4xf32>, vector<128x4xf32>, vector<128x4xf32>, vector<128x4xf32>, vector<128x4xf32> -> vector<128x36xf32>
    %c0_4 = arith.constant 0 : index
    %c0_5 = arith.constant 0 : index
    %24 = vector.load %arg3[%c0_4, %c0_5] : memref<36x128xf32, #tpu.memory_space<vmem>>, vector<36x128xf32>
    %cst = arith.constant dense<0.000000e+00> : vector<128x128xf32>
    %25 = tpu.matmul %23, %24, %cst {dimension_numbers = #tpu.dot_dimension_numbers<[1], [0], [0], [1], [0, 0, 1, 1], [], []>} : vector<128x36xf32>, vector<36x128xf32>, vector<128x128xf32> -> vector<128x128xf32>
    %c0_6 = arith.constant 0 : index
    %c0_7 = arith.constant 0 : index
    %26 = vector.load %arg4[%c0_6, %c0_7] : memref<1x128xf32, #tpu.memory_space<vmem>>, vector<1x128xf32>
    %27 = vector.broadcast %26 : vector<1x128xf32> to vector<128x128xf32>
    %28 = arith.mulf %25, %27 : vector<128x128xf32>
    %c0_8 = arith.constant 0 : index
    %c0_9 = arith.constant 0 : index
    %29 = vector.load %arg5[%c0_8, %c0_9] : memref<1x128xf32, #tpu.memory_space<vmem>>, vector<1x128xf32>
    %30 = vector.broadcast %29 : vector<1x128xf32> to vector<128x128xf32>
    %31 = arith.addf %28, %30 : vector<128x128xf32>
    %cst_10 = arith.constant 0.000000e+00 : f32
    %32 = vector.broadcast %cst_10 : f32 to vector<128x128xf32>
    %33 = arith.subf %32, %31 : vector<128x128xf32>
    %34 = math.exp %33 : vector<128x128xf32>
    %cst_11 = arith.constant 1.000000e+00 : f32
    %35 = vector.broadcast %cst_11 : f32 to vector<128x128xf32>
    %36 = arith.addf %35, %34 : vector<128x128xf32>
    %37 = tpu.reciprocal %36 : vector<128x128xf32> -> vector<128x128xf32>
    %38 = arith.mulf %31, %37 : vector<128x128xf32>
    %c0_12 = arith.constant 0 : index
    %c0_13 = arith.constant 0 : index
    %c0_14 = arith.constant 0 : index
    %c0_15 = arith.constant 0 : index
    %39 = vector.load %arg6[%c0_12, %c0_13, %c0_14, %c0_15] : memref<1x1x128x128xf32, #tpu.memory_space<vmem>>, vector<1x1x128x128xf32>
    %40 = vector.shape_cast %39 : vector<1x1x128x128xf32> to vector<128x128xf32>
    %41 = vector.shape_cast %38 : vector<128x128xf32> to vector<1x1x128x128xf32>
    tpu.vector_store %arg6[%c0_12, %c0_13, %c0_14, %c0_15], %41 {strides = array<i32>} : memref<1x1x128x128xf32, #tpu.memory_space<vmem>>, vector<1x1x128x128xf32>,
    return
  }
  func.func @transform_0(%arg0: i32, %arg1: i32) -> (i32, i32, i32, i32, i32) {
    %c0_i32 = arith.constant 0 : i32
    %c0_i32_0 = arith.constant 0 : i32
    %c0_i32_1 = arith.constant 0 : i32
    %c0_i32_2 = arith.constant 0 : i32
    return %arg0, %arg1, %c0_i32, %c0_i32_0, %c0_i32_1 : i32, i32, i32, i32, i32
  }
  func.func @transform_1(%arg0: i32, %arg1: i32) -> (i32, i32) {
    %c0_i32 = arith.constant 0 : i32
    %c0_i32_0 = arith.constant 0 : i32
    %c0_i32_1 = arith.constant 0 : i32
    return %c0_i32, %c0_i32_0 : i32, i32
  }
  func.func @transform_2(%arg0: i32, %arg1: i32) -> (i32, i32) {
    %c0_i32 = arith.constant 0 : i32
    %c0_i32_0 = arith.constant 0 : i32
    %c0_i32_1 = arith.constant 0 : i32
    return %c0_i32, %c0_i32_0 : i32, i32
  }
  func.func @transform_3(%arg0: i32, %arg1: i32) -> (i32, i32) {
    %c0_i32 = arith.constant 0 : i32
    %c0_i32_0 = arith.constant 0 : i32
    %c0_i32_1 = arith.constant 0 : i32
    return %c0_i32, %c0_i32_0 : i32, i32
  }
  func.func @transform_4(%arg0: i32, %arg1: i32) -> (i32, i32, i32, i32) {
    %c0_i32 = arith.constant 0 : i32
    %c0_i32_0 = arith.constant 0 : i32
    %c0_i32_1 = arith.constant 0 : i32
    return %arg0, %arg1, %c0_i32, %c0_i32_0 : i32, i32, i32, i32
  }
}

</mosaic_0001>

<llo_original>
// kernel: tpu_custom_call.1
$region0: #{tpu_custom_call.1}
  #allocation0 [shape = 'u32[]', space=smem, size = 0x4, offset = 0x4, fixed_abs, tag = 'smem constant byte address 0x4 - core index']
  #allocation1 [shape = 'u32[144,128]{1,0:T(1,128)}', space=vmem, size = 0x12000, scoped, tag = 'internal scratch']
  %s0 = inlined_call_operand.vmem [shape: f32[2,2,10,18,4], index: 0, kind: input, shape index: {}]
  %s1 = inlined_call_operand.vmem [shape: f32[36,128], index: 1, kind: input, shape index: {}]
  %s2 = inlined_call_operand.vmem [shape: f32[1,128], index: 2, kind: input, shape index: {}]
  %s3 = inlined_call_operand.vmem [shape: f32[1,128], index: 3, kind: input, shape index: {}]
  %s4 = inlined_call_operand.hbm [shape: f32[2,2,128,128], index: 4, kind: output, shape index: {}]
  %s5 = sld [smem:[#allocation0]]
  $region49: #{tpu_custom_call.1} parent=0
    _
  %s7 = ssub.s32 1, %s5
  %s8 = scalar_select 0, %s7, %s5
  $region1: #{tpu_custom_call.1} parent=0
    #allocation2 [shape = 'u8[131072]{0}', space=vmem, size = 0x20000, scoped, tag = 'output window, operand 0']
    #allocation3 [shape = 's32[2]{0}', space=sflag, size = 0x8, scoped, tag = 'scoped memory for tpu_custom_call.1']
    %9 = vsyncpa [#allocation3], 0
    %s10 = scalar_lea.sflag [#allocation3], 1
    %11 = vsyncpa %s10, 0
    loop: start=0, step=1, limit=6
    $region2: #{tpu_custom_call.1} parent=1 // loop_pre_header
      _
    $region3: #{tpu_custom_call.1} parent=1 // loop_header
      %s13 = sphi 0, %s17
      %p14 = scmp.ge.s32.totalorder %s13, 6
      %s20 = sphi 0, %s32
      %s21 = sphi 0, %s28
      %s22 = sphi 0, %s20
      %s23 = sphi 0, %s21
      %s24 = sphi 0, %s22
      %s25 = sphi 0, %s23
      %s37 = sphi 0, %s39
      %s40 = sphi 0, %s37
      %s41 = sphi 0, %s40
      %s57 = sphi 0, %s41
      %s61 = sphi 0, %s61
      %s63 = sphi 0, %s61
      %s64 = sphi 0, %s63
      %s78 = sphi 0, %s64
      %s82 = sphi 0, %s82
      %s84 = sphi 0, %s82
      %s85 = sphi 0, %s84
      %s99 = sphi 0, %s85
      %s103 = sphi 0, %s103
      %s105 = sphi 0, %s103
      %s106 = sphi 0, %s105
      %s120 = sphi 0, %s106
      %s128 = sphi 0, %s130
      %s131 = sphi 0, %s128
      %s132 = sphi 0, %s131
      %s148 = sphi 0, %s132
    $region4: #{tpu_custom_call.1} parent=1 // loop_header_branch
      %16 = sbr.rel (%p14) target = $region8
    $region5: #{tpu_custom_call.1} parent=1 // loop_body
      %s18 = ssub.s32 %s13, 1
      %s19 = ssub.s32 %s13, 2
      %s26 = sadd.s32 1, %s21
      %p27 = scmp.ge.s32.totalorder %s26, 2
      %s28 = scalar_select %p27, 0, %s26
      %s29 = sadd.s32 1, %s20
      %s30 = scalar_select %p27, %s29, %s20
      %p31 = scmp.ge.s32.totalorder %s30, 2
      %s32 = scalar_select %p31, 0, %s30
      %s33 = ssub.s32 %s20, %s32
      %s34 = ssub.s32 %s21, %s28
      %s35 = sor.u32 %s33, %s34
      %p36 = scmp.eq.s32.totalorder %s35, 0
      %s38 = sadd.s32 %s37, 1
      %s39 = scalar_select %p36, %s37, %s38
      %p42 = pneg %p36
      %p43 = scmp.eq.s32.totalorder %s13, 3
      %p44 = por %p42, %p43
      %p45 = scmp.ne.s32.totalorder %s37, %s40
      %p46 = scmp.eq.s32.totalorder %s13, 0
      %p47 = por %p45, %p46
      %p48 = scmp.ne.s32.totalorder %s37, %s40
      %p49 = scmp.eq.s32.totalorder %s18, 3
      %p50 = por %p48, %p49
      %p51 = scmp.ne.s32.totalorder %s40, %s41
      %p52 = scmp.eq.s32.totalorder %s18, 0
      %p53 = por %p51, %p52
      %p54 = scmp.ne.s32.totalorder %s40, %s41
      %p55 = scmp.eq.s32.totalorder %s19, 3
      %p56 = por %p54, %p55
      %p58 = scmp.ne.s32.totalorder %s41, %s57
      %p59 = scmp.eq.s32.totalorder %s19, 0
      %p60 = por %p58, %p59
      %s62 = sadd.s32 %s61, 1
      %p65 = scmp.eq.s32.totalorder %s13, 3
      %p66 = scmp.ne.s32.totalorder %s61, %s63
      %p67 = scmp.eq.s32.totalorder %s13, 0
      %p68 = por %p66, %p67
      %p69 = scmp.ne.s32.totalorder %s61, %s63
      %p70 = scmp.eq.s32.totalorder %s18, 3
      %p71 = por %p69, %p70
      %p72 = scmp.ne.s32.totalorder %s63, %s64
      %p73 = scmp.eq.s32.totalorder %s18, 0
      %p74 = por %p72, %p73
      %p75 = scmp.ne.s32.totalorder %s63, %s64
      %p76 = scmp.eq.s32.totalorder %s19, 3
      %p77 = por %p75, %p76
      %p79 = scmp.ne.s32.totalorder %s64, %s78
      %p80 = scmp.eq.s32.totalorder %s19, 0
      %p81 = por %p79, %p80
      %s83 = sadd.s32 %s82, 1
      %p86 = scmp.eq.s32.totalorder %s13, 3
      %p87 = scmp.ne.s32.totalorder %s82, %s84
      %p88 = scmp.eq.s32.totalorder %s13, 0
      %p89 = por %p87, %p88
      %p90 = scmp.ne.s32.totalorder %s82, %s84
      %p91 = scmp.eq.s32.totalorder %s18, 3
      %p92 = por %p90, %p91
      %p93 = scmp.ne.s32.totalorder %s84, %s85
      %p94 = scmp.eq.s32.totalorder %s18, 0
      %p95 = por %p93, %p94
      %p96 = scmp.ne.s32.totalorder %s84, %s85
      %p97 = scmp.eq.s32.totalorder %s19, 3
      %p98 = por %p96, %p97
      %p100 = scmp.ne.s32.totalorder %s85, %s99
      %p101 = scmp.eq.s32.totalorder %s19, 0
      %p102 = por %p100, %p101
      %s104 = sadd.s32 %s103, 1
      %p107 = scmp.eq.s32.totalorder %s13, 3
      %p108 = scmp.ne.s32.totalorder %s103, %s105
      %p109 = scmp.eq.s32.totalorder %s13, 0
      %p110 = por %p108, %p109
      %p111 = scmp.ne.s32.totalorder %s103, %s105
      %p112 = scmp.eq.s32.totalorder %s18, 3
      %p113 = por %p111, %p112
      %p114 = scmp.ne.s32.totalorder %s105, %s106
      %p115 = scmp.eq.s32.totalorder %s18, 0
      %p116 = por %p114, %p115
      %p117 = scmp.ne.s32.totalorder %s105, %s106
      %p118 = scmp.eq.s32.totalorder %s19, 3
      %p119 = por %p117, %p118
      %p121 = scmp.ne.s32.totalorder %s106, %s120
      %p122 = scmp.eq.s32.totalorder %s19, 0
      %p123 = por %p121, %p122
      %s124 = ssub.s32 %s20, %s32
      %s125 = ssub.s32 %s21, %s28
      %s126 = sor.u32 %s124, %s125
      %p127 = scmp.eq.s32.totalorder %s126, 0
      %s129 = sadd.s32 %s128, 1
      %s130 = scalar_select %p127, %s128, %s129
      %p133 = pneg %p127
      %p134 = scmp.eq.s32.totalorder %s13, 3
      %p135 = por %p133, %p134
      %p136 = scmp.ne.s32.totalorder %s128, %s131
      %p137 = scmp.eq.s32.totalorder %s13, 0
      %p138 = por %p136, %p137
      %p139 = scmp.ne.s32.totalorder %s128, %s131
      %p140 = scmp.eq.s32.totalorder %s18, 3
      %p141 = por %p139, %p140
      %p142 = scmp.ne.s32.totalorder %s131, %s132
      %p143 = scmp.eq.s32.totalorder %s18, 0
      %p144 = por %p142, %p143
      %p145 = scmp.ne.s32.totalorder %s131, %s132
      %p146 = scmp.eq.s32.totalorder %s19, 3
      %p147 = por %p145, %p146
      %p149 = scmp.ne.s32.totalorder %s132, %s148
      %p150 = scmp.eq.s32.totalorder %s19, 0
      %p151 = por %p149, %p150
      %p152 = scmp.le.s32.totalorder 1, %s13
      %p153 = scmp.lt.s32.totalorder %s13, 5
      %p154 = pnand %p152, %p153
      %p155 = pneg %p154
      // Predicated region
      $region9: #{tpu_custom_call.1} parent=5 // pred_check
        _
      $region10: #{tpu_custom_call.1} parent=5 // pred_check_branch
        %157 = sbr.rel (%p154) target = $region12
      $region11: #{tpu_custom_call.1} parent=5 // pred_region
        %s158 = ssub.s32 %s13, 1
        // Predicated region
        $region13: #{tpu_custom_call.1} parent=11 // pred_check
          %p159 = pneg %p74
        $region14: #{tpu_custom_call.1} parent=11 // pred_check_branch
          %161 = sbr.rel (%p159) target = $region16
        $region15: #{tpu_custom_call.1} parent=11 // pred_region
          _
        $region16: #{tpu_custom_call.1} parent=11 // pred_fallthru
          _
        // Predicated region
        $region17: #{tpu_custom_call.1} parent=11 // pred_check
          %p162 = pneg %p95
        $region18: #{tpu_custom_call.1} parent=11 // pred_check_branch
          %164 = sbr.rel (%p162) target = $region20
        $region19: #{tpu_custom_call.1} parent=11 // pred_region
          _
        $region20: #{tpu_custom_call.1} parent=11 // pred_fallthru
          _
        // Predicated region
        $region21: #{tpu_custom_call.1} parent=11 // pred_check
          %p165 = pneg %p116
        $region22: #{tpu_custom_call.1} parent=11 // pred_check_branch
          %167 = sbr.rel (%p165) target = $region24
        $region23: #{tpu_custom_call.1} parent=11 // pred_region
          _
        $region24: #{tpu_custom_call.1} parent=11 // pred_fallthru
          _
      $region12: #{tpu_custom_call.1} parent=5 // pred_fallthru
        _
      %p168 = scmp.lt.s32.totalorder %s13, 4
      // Predicated region
      $region25: #{tpu_custom_call.1} parent=5 // pred_check
        %p169 = pneg %p168
      $region26: #{tpu_custom_call.1} parent=5 // pred_check_branch
        %171 = sbr.rel (%p169) target = $region28
      $region27: #{tpu_custom_call.1} parent=5 // pred_region
        // Predicated region
        $region29: #{tpu_custom_call.1} parent=27 // pred_check
          %p172 = pneg %p47
        $region30: #{tpu_custom_call.1} parent=27 // pred_check_branch
          %174 = sbr.rel (%p172) target = $region32
        $region31: #{tpu_custom_call.1} parent=27 // pred_region
          %p175 = scmp.lt.s32.totalorder %s20, 1
          %s176 = scalar_select %p175, %s20, 1
          %p177 = scmp.lt.s32.totalorder %s21, 1
          %s178 = scalar_select %p177, %s21, 1
          %s179 = smul.addr %s178, 30
          %s180 = smul.addr %s176, 60
          %s181 = sadd.s32 %s179, %s180
          %s182 = smul.addr %s181, 8
          %s183 = scalar_lea.vmem %s0, %s182
        $region32: #{tpu_custom_call.1} parent=27 // pred_fallthru
          _
      $region28: #{tpu_custom_call.1} parent=5 // pred_fallthru
        _
      %p184 = scmp.le.s32.totalorder 1, %s13
      %p185 = scmp.lt.s32.totalorder %s13, 5
      %p186 = pnand %p184, %p185
      %p187 = pneg %p186
      // Predicated region
      $region33: #{tpu_custom_call.1} parent=5 // pred_check
        _
      $region34: #{tpu_custom_call.1} parent=5 // pred_check_branch
        %189 = sbr.rel (%p186) target = $region36
      $region35: #{tpu_custom_call.1} parent=5 // pred_region
        %s190 = ssub.s32 %s13, 1
        %p191 = scmp.lt.s32.totalorder %s22, 1
        %s192 = scalar_select %p191, %s22, 1
        %p193 = scmp.lt.s32.totalorder %s23, 1
        %s194 = scalar_select %p193, %s23, 1
        %s195 = smul.addr %s194, 30
        %s196 = smul.addr %s192, 60
        %s197 = sadd.s32 %s195, %s196
        %s198 = smul.addr %s197, 8
        %s199 = scalar_lea.vmem %s0, %s198
        %p200 = pneg %p53
        %p201 = pneg %p50
        %p202 = pneg %p74
        %p203 = pneg %p71
        %p204 = pneg %p95
        %p205 = pneg %p92
        %p206 = pneg %p116
        %p207 = pneg %p113
        %p208 = pneg %p144
        %p209 = pneg %p141
        %s210 = sand.u32 %s131, 1
        %s211 = scalar_lea.sflag [#allocation3], %s210
        %s212 = sand.u32 %s131, 1
        %s213 = smul.addr %s212, 128
        %s214 = scalar_lea.vmem [#allocation2], %s213
        %p215 = scmp.lt.s32.totalorder %s22, 1
        %s216 = scalar_select %p215, %s22, 1
        %p217 = scmp.lt.s32.totalorder %s23, 1
        %s218 = scalar_select %p217, %s23, 1
        %s219 = smul.addr %s218, 30
        %s220 = smul.addr %s216, 60
        %s221 = sadd.s32 %s219, %s220
        %s222 = smul.addr %s221, 8
        %s223 = scalar_lea.vmem %s0, %s222
        %v224 = vld [vmem:[%s223] sm:$0xff]
        %v225 = vld [vmem:[%s223 + $0x8] sm:$0xff]
        %v226 = vld [vmem:[%s223 + $0x10] sm:$0x3]
        %v227 = vld [vmem:[%s223 + $0x18] sm:$0xff]
        %v228 = vld [vmem:[%s223 + $0x20] sm:$0xff]
        %v229 = vld [vmem:[%s223 + $0x28] sm:$0x3]
        %v230 = vld [vmem:[%s223 + $0x30] sm:$0xff]
        %v231 = vld [vmem:[%s223 + $0x38] sm:$0xff]
        %v232 = vld [vmem:[%s223 + $0x40] sm:$0x3]
        %v233 = vld [vmem:[%s223 + $0x48] sm:$0xff]
        %v234 = vld [vmem:[%s223 + $0x50] sm:$0xff]
        %v235 = vld [vmem:[%s223 + $0x58] sm:$0x3]
        %v236 = vld [vmem:[%s223 + $0x60] sm:$0xff]
        %v237 = vld [vmem:[%s223 + $0x68] sm:$0xff]
        %v238 = vld [vmem:[%s223 + $0x70] sm:$0x3]
        %v239 = vld [vmem:[%s223 + $0x78] sm:$0xff]
        %v240 = vld [vmem:[%s223 + $0x80] sm:$0xff]
        %v241 = vld [vmem:[%s223 + $0x88] sm:$0x3]
        %v242 = vld [vmem:[%s223 + $0x90] sm:$0xff]
        %v243 = vld [vmem:[%s223 + $0x98] sm:$0xff]
        %v244 = vld [vmem:[%s223 + $0xa0] sm:$0x3]
        %v245 = vld [vmem:[%s223 + $0xa8] sm:$0xff]
        %v246 = vld [vmem:[%s223 + $0xb0] sm:$0xff]
        %v247 = vld [vmem:[%s223 + $0xb8] sm:$0x3]
        %v248 = vld [vmem:[%s223 + $0xc0] sm:$0xff]
        %v249 = vld [vmem:[%s223 + $0xc8] sm:$0xff]
        %v250 = vld [vmem:[%s223 + $0xd0] sm:$0x3]
        %v251 = vld [vmem:[%s223 + $0xd8] sm:$0xff]
        %v252 = vld [vmem:[%s223 + $0xe0] sm:$0xff]
        %v253 = vld [vmem:[%s223 + $0xe8] sm:$0x3]
        %vm278 = vcmask 1046528
        %v279 = vrot.slane %v224, 1
        %v280 = vrot.slane %v225, 1
        %v281 = vsel %vm278, %v279, %v280
        %v282 = vrot.slane %v226, 1
        %v283 = vsel %vm278, %v280, %v282
        %v284 = vrot.slane %v227, 1
        %v285 = vrot.slane %v228, 1
        %v286 = vsel %vm278, %v284, %v285
        %v287 = vrot.slane %v229, 1
        %v288 = vsel %vm278, %v285, %v287
        %v289 = vrot.slane %v230, 1
        %v290 = vrot.slane %v231, 1
        %v291 = vsel %vm278, %v289, %v290
        %v292 = vrot.slane %v232, 1
        %v293 = vsel %vm278, %v290, %v292
        %v294 = vrot.slane %v233, 1
        %v295 = vrot.slane %v234, 1
        %v296 = vsel %vm278, %v294, %v295
        %v297 = vrot.slane %v235, 1
        %v298 = vsel %vm278, %v295, %v297
        %v299 = vrot.slane %v236, 1
        %v300 = vrot.slane %v237, 1
        %v301 = vsel %vm278, %v299, %v300
        %v302 = vrot.slane %v238, 1
        %v303 = vsel %vm278, %v300, %v302
        %v304 = vrot.slane %v239, 1
        %v305 = vrot.slane %v240, 1
        %v306 = vsel %vm278, %v304, %v305
        %v307 = vrot.slane %v241, 1
        %v308 = vsel %vm278, %v305, %v307
        %v309 = vrot.slane %v242, 1
        %v310 = vrot.slane %v243, 1
        %v311 = vsel %vm278, %v309, %v310
        %v312 = vrot.slane %v244, 1
        %v313 = vsel %vm278, %v310, %v312
        %v314 = vrot.slane %v245, 1
        %v315 = vrot.slane %v246, 1
        %v316 = vsel %vm278, %v314, %v315
        %v317 = vrot.slane %v247, 1
        %v318 = vsel %vm278, %v315, %v317
        %vm319 = vcmask 1045504
        %v320 = vrot.slane %v224, 2
        %v321 = vrot.slane %v225, 2
        %v322 = vsel %vm319, %v320, %v321
        %v323 = vrot.slane %v226, 2
        %v324 = vsel %vm319, %v321, %v323
        %v325 = vrot.slane %v227, 2
        %v326 = vrot.slane %v228, 2
        %v327 = vsel %vm319, %v325, %v326
        %v328 = vrot.slane %v229, 2
        %v329 = vsel %vm319, %v326, %v328
        %v330 = vrot.slane %v230, 2
        %v331 = vrot.slane %v231, 2
        %v332 = vsel %vm319, %v330, %v331
        %v333 = vrot.slane %v232, 2
        %v334 = vsel %vm319, %v331, %v333
        %v335 = vrot.slane %v233, 2
        %v336 = vrot.slane %v234, 2
        %v337 = vsel %vm319, %v335, %v336
        %v338 = vrot.slane %v235, 2
        %v339 = vsel %vm319, %v336, %v338
        %v340 = vrot.slane %v236, 2
        %v341 = vrot.slane %v237, 2
        %v342 = vsel %vm319, %v340, %v341
        %v343 = vrot.slane %v238, 2
        %v344 = vsel %vm319, %v341, %v343
        %v345 = vrot.slane %v239, 2
        %v346 = vrot.slane %v240, 2
        %v347 = vsel %vm319, %v345, %v346
        %v348 = vrot.slane %v241, 2
        %v349 = vsel %vm319, %v346, %v348
        %v350 = vrot.slane %v242, 2
        %v351 = vrot.slane %v243, 2
        %v352 = vsel %vm319, %v350, %v351
        %v353 = vrot.slane %v244, 2
        %v354 = vsel %vm319, %v351, %v353
        %v355 = vrot.slane %v245, 2
        %v356 = vrot.slane %v246, 2
        %v357 = vsel %vm319, %v355, %v356
        %v358 = vrot.slane %v247, 2
        %v359 = vsel %vm319, %v356, %v358
        %v363 = vrot.slane %v248, 1
        %v364 = vrot.slane %v249, 1
        %v365 = vsel %vm278, %v363, %v364
        %v366 = vrot.slane %v250, 1
        %v367 = vsel %vm278, %v364, %v366
        %v368 = vrot.slane %v248, 2
        %v369 = vrot.slane %v249, 2
        %v370 = vsel %vm319, %v368, %v369
        %v371 = vrot.slane %v250, 2
        %v372 = vsel %vm319, %v369, %v371
        %v376 = vrot.slane %v251, 1
        %v377 = vrot.slane %v252, 1
        %v378 = vsel %vm278, %v376, %v377
        %v379 = vrot.slane %v253, 1
        %v380 = vsel %vm278, %v377, %v379
        %v381 = vrot.slane %v251, 2
        %v382 = vrot.slane %v252, 2
        %v383 = vsel %vm319, %v381, %v382
        %v384 = vrot.slane %v253, 2
        %v385 = vsel %vm319, %v382, %v384
        %386 = vrot.lane.b32.xlu0 %v281, 4
        %v387 = vpop.permute.xlu0 %386
        %388 = vrot.lane.b32.xlu0 %v283, 4
        %v389 = vpop.permute.xlu0 %388
        %390 = vrot.lane.b32.xlu0 %v286, 4
        %v391 = vpop.permute.xlu0 %390
        %392 = vrot.lane.b32.xlu0 %v288, 4
        %v393 = vpop.permute.xlu0 %392
        %394 = vrot.lane.b32.xlu0 %v291, 4
        %v395 = vpop.permute.xlu0 %394
        %396 = vrot.lane.b32.xlu0 %v293, 4
        %v397 = vpop.permute.xlu0 %396
        %398 = vrot.lane.b32.xlu0 %v296, 4
        %v399 = vpop.permute.xlu0 %398
        %400 = vrot.lane.b32.xlu0 %v298, 4
        %v401 = vpop.permute.xlu0 %400
        %402 = vrot.lane.b32.xlu0 %v301, 4
        %v403 = vpop.permute.xlu0 %402
        %404 = vrot.lane.b32.xlu0 %v303, 4
        %v405 = vpop.permute.xlu0 %404
        %406 = vrot.lane.b32.xlu0 %v306, 4
        %v407 = vpop.permute.xlu0 %406
        %408 = vrot.lane.b32.xlu0 %v308, 4
        %v409 = vpop.permute.xlu0 %408
        %410 = vrot.lane.b32.xlu0 %v311, 4
        %v411 = vpop.permute.xlu0 %410
        %412 = vrot.lane.b32.xlu0 %v313, 4
        %v413 = vpop.permute.xlu0 %412
        %414 = vrot.lane.b32.xlu0 %v316, 4
        %v415 = vpop.permute.xlu0 %414
        %416 = vrot.lane.b32.xlu0 %v318, 4
        %v417 = vpop.permute.xlu0 %416
        %434 = vrot.lane.b32.xlu0 %v322, 8
        %v435 = vpop.permute.xlu0 %434
        %436 = vrot.lane.b32.xlu0 %v324, 8
        %v437 = vpop.permute.xlu0 %436
        %438 = vrot.lane.b32.xlu0 %v327, 8
        %v439 = vpop.permute.xlu0 %438
        %440 = vrot.lane.b32.xlu0 %v329, 8
        %v441 = vpop.permute.xlu0 %440
        %442 = vrot.lane.b32.xlu0 %v332, 8
        %v443 = vpop.permute.xlu0 %442
        %444 = vrot.lane.b32.xlu0 %v334, 8
        %v445 = vpop.permute.xlu0 %444
        %446 = vrot.lane.b32.xlu0 %v337, 8
        %v447 = vpop.permute.xlu0 %446
        %448 = vrot.lane.b32.xlu0 %v339, 8
        %v449 = vpop.permute.xlu0 %448
        %450 = vrot.lane.b32.xlu0 %v342, 8
        %v451 = vpop.permute.xlu0 %450
        %452 = vrot.lane.b32.xlu0 %v344, 8
        %v453 = vpop.permute.xlu0 %452
        %454 = vrot.lane.b32.xlu0 %v347, 8
        %v455 = vpop.permute.xlu0 %454
        %456 = vrot.lane.b32.xlu0 %v349, 8
        %v457 = vpop.permute.xlu0 %456
        %458 = vrot.lane.b32.xlu0 %v352, 8
        %v459 = vpop.permute.xlu0 %458
        %460 = vrot.lane.b32.xlu0 %v354, 8
        %v461 = vpop.permute.xlu0 %460
        %462 = vrot.lane.b32.xlu0 %v357, 8
        %v463 = vpop.permute.xlu0 %462
        %464 = vrot.lane.b32.xlu0 %v359, 8
        %v465 = vpop.permute.xlu0 %464
        %482 = vrot.lane.b32.xlu0 %v227, 12
        %v483 = vpop.permute.xlu0 %482
        %484 = vrot.lane.b32.xlu0 %v228, 12
        %v485 = vpop.permute.xlu0 %484
        %486 = vrot.lane.b32.xlu0 %v230, 12
        %v487 = vpop.permute.xlu0 %486
        %488 = vrot.lane.b32.xlu0 %v231, 12
        %v489 = vpop.permute.xlu0 %488
        %490 = vrot.lane.b32.xlu0 %v233, 12
        %v491 = vpop.permute.xlu0 %490
        %492 = vrot.lane.b32.xlu0 %v234, 12
        %v493 = vpop.permute.xlu0 %492
        %494 = vrot.lane.b32.xlu0 %v236, 12
        %v495 = vpop.permute.xlu0 %494
        %496 = vrot.lane.b32.xlu0 %v237, 12
        %v497 = vpop.permute.xlu0 %496
        %498 = vrot.lane.b32.xlu0 %v239, 12
        %v499 = vpop.permute.xlu0 %498
        %500 = vrot.lane.b32.xlu0 %v240, 12
        %v501 = vpop.permute.xlu0 %500
        %502 = vrot.lane.b32.xlu0 %v242, 12
        %v503 = vpop.permute.xlu0 %502
        %504 = vrot.lane.b32.xlu0 %v243, 12
        %v505 = vpop.permute.xlu0 %504
        %506 = vrot.lane.b32.xlu0 %v245, 12
        %v507 = vpop.permute.xlu0 %506
        %508 = vrot.lane.b32.xlu0 %v246, 12
        %v509 = vpop.permute.xlu0 %508
        %510 = vrot.lane.b32.xlu0 %v248, 12
        %v511 = vpop.permute.xlu0 %510
        %512 = vrot.lane.b32.xlu0 %v249, 12
        %v513 = vpop.permute.xlu0 %512
        %530 = vrot.lane.b32.xlu0 %v286, 16
        %v531 = vpop.permute.xlu0 %530
        %532 = vrot.lane.b32.xlu0 %v288, 16
        %v533 = vpop.permute.xlu0 %532
        %534 = vrot.lane.b32.xlu0 %v291, 16
        %v535 = vpop.permute.xlu0 %534
        %536 = vrot.lane.b32.xlu0 %v293, 16
        %v537 = vpop.permute.xlu0 %536
        %538 = vrot.lane.b32.xlu0 %v296, 16
        %v539 = vpop.permute.xlu0 %538
        %540 = vrot.lane.b32.xlu0 %v298, 16
        %v541 = vpop.permute.xlu0 %540
        %542 = vrot.lane.b32.xlu0 %v301, 16
        %v543 = vpop.permute.xlu0 %542
        %544 = vrot.lane.b32.xlu0 %v303, 16
        %v545 = vpop.permute.xlu0 %544
        %546 = vrot.lane.b32.xlu0 %v306, 16
        %v547 = vpop.permute.xlu0 %546
        %548 = vrot.lane.b32.xlu0 %v308, 16
        %v549 = vpop.permute.xlu0 %548
        %550 = vrot.lane.b32.xlu0 %v311, 16
        %v551 = vpop.permute.xlu0 %550
        %552 = vrot.lane.b32.xlu0 %v313, 16
        %v553 = vpop.permute.xlu0 %552
        %554 = vrot.lane.b32.xlu0 %v316, 16
        %v555 = vpop.permute.xlu0 %554
        %556 = vrot.lane.b32.xlu0 %v318, 16
        %v557 = vpop.permute.xlu0 %556
        %558 = vrot.lane.b32.xlu0 %v365, 16
        %v559 = vpop.permute.xlu0 %558
        %560 = vrot.lane.b32.xlu0 %v367, 16
        %v561 = vpop.permute.xlu0 %560
        %578 = vrot.lane.b32.xlu0 %v327, 20
        %v579 = vpop.permute.xlu0 %578
        %580 = vrot.lane.b32.xlu0 %v329, 20
        %v581 = vpop.permute.xlu0 %580
        %582 = vrot.lane.b32.xlu0 %v332, 20
        %v583 = vpop.permute.xlu0 %582
        %584 = vrot.lane.b32.xlu0 %v334, 20
        %v585 = vpop.permute.xlu0 %584
        %586 = vrot.lane.b32.xlu0 %v337, 20
        %v587 = vpop.permute.xlu0 %586
        %588 = vrot.lane.b32.xlu0 %v339, 20
        %v589 = vpop.permute.xlu0 %588
        %590 = vrot.lane.b32.xlu0 %v342, 20
        %v591 = vpop.permute.xlu0 %590
        %592 = vrot.lane.b32.xlu0 %v344, 20
        %v593 = vpop.permute.xlu0 %592
        %594 = vrot.lane.b32.xlu0 %v347, 20
        %v595 = vpop.permute.xlu0 %594
        %596 = vrot.lane.b32.xlu0 %v349, 20
        %v597 = vpop.permute.xlu0 %596
        %598 = vrot.lane.b32.xlu0 %v352, 20
        %v599 = vpop.permute.xlu0 %598
        %600 = vrot.lane.b32.xlu0 %v354, 20
        %v601 = vpop.permute.xlu0 %600
        %602 = vrot.lane.b32.xlu0 %v357, 20
        %v603 = vpop.permute.xlu0 %602
        %604 = vrot.lane.b32.xlu0 %v359, 20
        %v605 = vpop.permute.xlu0 %604
        %606 = vrot.lane.b32.xlu0 %v370, 20
        %v607 = vpop.permute.xlu0 %606
        %608 = vrot.lane.b32.xlu0 %v372, 20
        %v609 = vpop.permute.xlu0 %608
        %626 = vrot.lane.b32.xlu0 %v230, 24
        %v627 = vpop.permute.xlu0 %626
        %628 = vrot.lane.b32.xlu0 %v231, 24
        %v629 = vpop.permute.xlu0 %628
        %630 = vrot.lane.b32.xlu0 %v233, 24
        %v631 = vpop.permute.xlu0 %630
        %632 = vrot.lane.b32.xlu0 %v234, 24
        %v633 = vpop.permute.xlu0 %632
        %634 = vrot.lane.b32.xlu0 %v236, 24
        %v635 = vpop.permute.xlu0 %634
        %636 = vrot.lane.b32.xlu0 %v237, 24
        %v637 = vpop.permute.xlu0 %636
        %638 = vrot.lane.b32.xlu0 %v239, 24
        %v639 = vpop.permute.xlu0 %638
        %640 = vrot.lane.b32.xlu0 %v240, 24
        %v641 = vpop.permute.xlu0 %640
        %642 = vrot.lane.b32.xlu0 %v242, 24
        %v643 = vpop.permute.xlu0 %642
        %644 = vrot.lane.b32.xlu0 %v243, 24
        %v645 = vpop.permute.xlu0 %644
        %646 = vrot.lane.b32.xlu0 %v245, 24
        %v647 = vpop.permute.xlu0 %646
        %648 = vrot.lane.b32.xlu0 %v246, 24
        %v649 = vpop.permute.xlu0 %648
        %650 = vrot.lane.b32.xlu0 %v248, 24
        %v651 = vpop.permute.xlu0 %650
        %652 = vrot.lane.b32.xlu0 %v249, 24
        %v653 = vpop.permute.xlu0 %652
        %654 = vrot.lane.b32.xlu0 %v251, 24
        %v655 = vpop.permute.xlu0 %654
        %656 = vrot.lane.b32.xlu0 %v252, 24
        %v657 = vpop.permute.xlu0 %656
        %674 = vrot.lane.b32.xlu0 %v291, 28
        %v675 = vpop.permute.xlu0 %674
        %676 = vrot.lane.b32.xlu0 %v293, 28
        %v677 = vpop.permute.xlu0 %676
        %678 = vrot.lane.b32.xlu0 %v296, 28
        %v679 = vpop.permute.xlu0 %678
        %680 = vrot.lane.b32.xlu0 %v298, 28
        %v681 = vpop.permute.xlu0 %680
        %682 = vrot.lane.b32.xlu0 %v301, 28
        %v683 = vpop.permute.xlu0 %682
        %684 = vrot.lane.b32.xlu0 %v303, 28
        %v685 = vpop.permute.xlu0 %684
        %686 = vrot.lane.b32.xlu0 %v306, 28
        %v687 = vpop.permute.xlu0 %686
        %688 = vrot.lane.b32.xlu0 %v308, 28
        %v689 = vpop.permute.xlu0 %688
        %690 = vrot.lane.b32.xlu0 %v311, 28
        %v691 = vpop.permute.xlu0 %690
        %692 = vrot.lane.b32.xlu0 %v313, 28
        %v693 = vpop.permute.xlu0 %692
        %694 = vrot.lane.b32.xlu0 %v316, 28
        %v695 = vpop.permute.xlu0 %694
        %696 = vrot.lane.b32.xlu0 %v318, 28
        %v697 = vpop.permute.xlu0 %696
        %698 = vrot.lane.b32.xlu0 %v365, 28
        %v699 = vpop.permute.xlu0 %698
        %700 = vrot.lane.b32.xlu0 %v367, 28
        %v701 = vpop.permute.xlu0 %700
        %702 = vrot.lane.b32.xlu0 %v378, 28
        %v703 = vpop.permute.xlu0 %702
        %704 = vrot.lane.b32.xlu0 %v380, 28
        %v705 = vpop.permute.xlu0 %704
        %722 = vrot.lane.b32.xlu0 %v332, 32
        %v723 = vpop.permute.xlu0 %722
        %724 = vrot.lane.b32.xlu0 %v334, 32
        %v725 = vpop.permute.xlu0 %724
        %726 = vrot.lane.b32.xlu0 %v337, 32
        %v727 = vpop.permute.xlu0 %726
        %728 = vrot.lane.b32.xlu0 %v339, 32
        %v729 = vpop.permute.xlu0 %728
        %730 = vrot.lane.b32.xlu0 %v342, 32
        %v731 = vpop.permute.xlu0 %730
        %732 = vrot.lane.b32.xlu0 %v344, 32
        %v733 = vpop.permute.xlu0 %732
        %734 = vrot.lane.b32.xlu0 %v347, 32
        %v735 = vpop.permute.xlu0 %734
        %736 = vrot.lane.b32.xlu0 %v349, 32
        %v737 = vpop.permute.xlu0 %736
        %738 = vrot.lane.b32.xlu0 %v352, 32
        %v739 = vpop.permute.xlu0 %738
        %740 = vrot.lane.b32.xlu0 %v354, 32
        %v741 = vpop.permute.xlu0 %740
        %742 = vrot.lane.b32.xlu0 %v357, 32
        %v743 = vpop.permute.xlu0 %742
        %744 = vrot.lane.b32.xlu0 %v359, 32
        %v745 = vpop.permute.xlu0 %744
        %746 = vrot.lane.b32.xlu0 %v370, 32
        %v747 = vpop.permute.xlu0 %746
        %748 = vrot.lane.b32.xlu0 %v372, 32
        %v749 = vpop.permute.xlu0 %748
        %750 = vrot.lane.b32.xlu0 %v383, 32
        %v751 = vpop.permute.xlu0 %750
        %752 = vrot.lane.b32.xlu0 %v385, 32
        %v753 = vpop.permute.xlu0 %752
        %vm770 = vcmask 31744
        %v771 = vsel %vm770, %v224, %v387
        %v772 = vsel %vm770, %v225, %v389
        %v773 = vsel %vm770, %v227, %v391
        %v774 = vsel %vm770, %v228, %v393
        %v775 = vsel %vm770, %v230, %v395
        %v776 = vsel %vm770, %v231, %v397
        %v777 = vsel %vm770, %v233, %v399
        %v778 = vsel %vm770, %v234, %v401
        %v779 = vsel %vm770, %v236, %v403
        %v780 = vsel %vm770, %v237, %v405
        %v781 = vsel %vm770, %v239, %v407
        %v782 = vsel %vm770, %v240, %v409
        %v783 = vsel %vm770, %v242, %v411
        %v784 = vsel %vm770, %v243, %v413
        %v785 = vsel %vm770, %v245, %v415
        %v786 = vsel %vm770, %v246, %v417
        %vm787 = vcmask 64512
        %v788 = vsel %vm787, %v771, %v435
        %v789 = vsel %vm787, %v772, %v437
        %v790 = vsel %vm787, %v773, %v439
        %v791 = vsel %vm787, %v774, %v441
        %v792 = vsel %vm787, %v775, %v443
        %v793 = vsel %vm787, %v776, %v445
        %v794 = vsel %vm787, %v777, %v447
        %v795 = vsel %vm787, %v778, %v449
        %v796 = vsel %vm787, %v779, %v451
        %v797 = vsel %vm787, %v780, %v453
        %v798 = vsel %vm787, %v781, %v455
        %v799 = vsel %vm787, %v782, %v457
        %v800 = vsel %vm787, %v783, %v459
        %v801 = vsel %vm787, %v784, %v461
        %v802 = vsel %vm787, %v785, %v463
        %v803 = vsel %vm787, %v786, %v465
        %vm804 = vcmask 97280
        %v805 = vsel %vm804, %v788, %v483
        %v806 = vsel %vm804, %v789, %v485
        %v807 = vsel %vm804, %v790, %v487
        %v808 = vsel %vm804, %v791, %v489
        %v809 = vsel %vm804, %v792, %v491
        %v810 = vsel %vm804, %v793, %v493
        %v811 = vsel %vm804, %v794, %v495
        %v812 = vsel %vm804, %v795, %v497
        %v813 = vsel %vm804, %v796, %v499
        %v814 = vsel %vm804, %v797, %v501
        %v815 = vsel %vm804, %v798, %v503
        %v816 = vsel %vm804, %v799, %v505
        %v817 = vsel %vm804, %v800, %v507
        %v818 = vsel %vm804, %v801, %v509
        %v819 = vsel %vm804, %v802, %v511
        %v820 = vsel %vm804, %v803, %v513
        %vm821 = vcmask 130048
        %v822 = vsel %vm821, %v805, %v531
        %v823 = vsel %vm821, %v806, %v533
        %v824 = vsel %vm821, %v807, %v535
        %v825 = vsel %vm821, %v808, %v537
        %v826 = vsel %vm821, %v809, %v539
        %v827 = vsel %vm821, %v810, %v541
        %v828 = vsel %vm821, %v811, %v543
        %v829 = vsel %vm821, %v812, %v545
        %v830 = vsel %vm821, %v813, %v547
        %v831 = vsel %vm821, %v814, %v549
        %v832 = vsel %vm821, %v815, %v551
        %v833 = vsel %vm821, %v816, %v553
        %v834 = vsel %vm821, %v817, %v555
        %v835 = vsel %vm821, %v818, %v557
        %v836 = vsel %vm821, %v819, %v559
        %v837 = vsel %vm821, %v820, %v561
        %vm838 = vcmask 162816
        %v839 = vsel %vm838, %v822, %v579
        %v840 = vsel %vm838, %v823, %v581
        %v841 = vsel %vm838, %v824, %v583
        %v842 = vsel %vm838, %v825, %v585
        %v843 = vsel %vm838, %v826, %v587
        %v844 = vsel %vm838, %v827, %v589
        %v845 = vsel %vm838, %v828, %v591
        %v846 = vsel %vm838, %v829, %v593
        %v847 = vsel %vm838, %v830, %v595
        %v848 = vsel %vm838, %v831, %v597
        %v849 = vsel %vm838, %v832, %v599
        %v850 = vsel %vm838, %v833, %v601
        %v851 = vsel %vm838, %v834, %v603
        %v852 = vsel %vm838, %v835, %v605
        %v853 = vsel %vm838, %v836, %v607
        %v854 = vsel %vm838, %v837, %v609
        %vm855 = vcmask 195584
        %v856 = vsel %vm855, %v839, %v627
        %v857 = vsel %vm855, %v840, %v629
        %v858 = vsel %vm855, %v841, %v631
        %v859 = vsel %vm855, %v842, %v633
        %v860 = vsel %vm855, %v843, %v635
        %v861 = vsel %vm855, %v844, %v637
        %v862 = vsel %vm855, %v845, %v639
        %v863 = vsel %vm855, %v846, %v641
        %v864 = vsel %vm855, %v847, %v643
        %v865 = vsel %vm855, %v848, %v645
        %v866 = vsel %vm855, %v849, %v647
        %v867 = vsel %vm855, %v850, %v649
        %v868 = vsel %vm855, %v851, %v651
        %v869 = vsel %vm855, %v852, %v653
        %v870 = vsel %vm855, %v853, %v655
        %v871 = vsel %vm855, %v854, %v657
        %vm872 = vcmask 228352
        %v873 = vsel %vm872, %v856, %v675
        %v874 = vsel %vm872, %v857, %v677
        %v875 = vsel %vm872, %v858, %v679
        %v876 = vsel %vm872, %v859, %v681
        %v877 = vsel %vm872, %v860, %v683
        %v878 = vsel %vm872, %v861, %v685
        %v879 = vsel %vm872, %v862, %v687
        %v880 = vsel %vm872, %v863, %v689
        %v881 = vsel %vm872, %v864, %v691
        %v882 = vsel %vm872, %v865, %v693
        %v883 = vsel %vm872, %v866, %v695
        %v884 = vsel %vm872, %v867, %v697
        %v885 = vsel %vm872, %v868, %v699
        %v886 = vsel %vm872, %v869, %v701
        %v887 = vsel %vm872, %v870, %v703
        %v888 = vsel %vm872, %v871, %v705
        %vm889 = vcmask 261120
        %v890 = vsel %vm889, %v873, %v723
        %v891 = vsel %vm889, %v874, %v725
        %v892 = vsel %vm889, %v875, %v727
        %v893 = vsel %vm889, %v876, %v729
        %v894 = vsel %vm889, %v877, %v731
        %v895 = vsel %vm889, %v878, %v733
        %v896 = vsel %vm889, %v879, %v735
        %v897 = vsel %vm889, %v880, %v737
        %v898 = vsel %vm889, %v881, %v739
        %v899 = vsel %vm889, %v882, %v741
        %v900 = vsel %vm889, %v883, %v743
        %v901 = vsel %vm889, %v884, %v745
        %v902 = vsel %vm889, %v885, %v747
        %v903 = vsel %vm889, %v886, %v749
        %v904 = vsel %vm889, %v887, %v751
        %v905 = vsel %vm889, %v888, %v753
        %v906 = vld [vmem:[%s1] sm:$0xff]
        %v907 = vld [vmem:[%s1 + $0x8] sm:$0xff]
        %v908 = vld [vmem:[%s1 + $0x10] sm:$0xff]
        %v909 = vld [vmem:[%s1 + $0x18] sm:$0xff]
        %v910 = vld [vmem:[%s1 + $0x20] sm:$0xf]
        %vm911 = vcmask 293888
        %v913 = vsel %vm911, %v890, 0
        %v916 = vsel %vm911, %v891, 0
        %v919 = vsel %vm911, %v892, 0
        %v922 = vsel %vm911, %v893, 0
        %v925 = vsel %vm911, %v894, 0
        %v928 = vsel %vm911, %v895, 0
        %v931 = vsel %vm911, %v896, 0
        %v934 = vsel %vm911, %v897, 0
        %v937 = vsel %vm911, %v898, 0
        %v940 = vsel %vm911, %v899, 0
        %v943 = vsel %vm911, %v900, 0
        %v946 = vsel %vm911, %v901, 0
        %v949 = vsel %vm911, %v902, 0
        %v952 = vsel %vm911, %v903, 0
        %v955 = vsel %vm911, %v904, 0
        %v958 = vsel %vm911, %v905, 0
        %vm960 = vcmask 1043456
        %v962 = vsel %vm960, %v910, 0
        %964 = vmatprep.subr.mxu0 0.0
        %965 = vmatpush1.msra.mxu0 %v906
        %966 = vmatprep.subr.mxu0 0.0
        %967 = vmatpush1.msra.mxu0 %v907
        %968 = vmatprep.subr.mxu0 0.0
        %969 = vmatpush1.msra.mxu0 %v908
        %970 = vmatprep.subr.mxu0 0.0
        %971 = vmatpush1.msra.mxu0 %v909
        %972 = vmatprep.subr.mxu0 0.0
        %973 = vmatpush1.msra.mxu0 %v962
        %974 = vmatprep.subr.mxu0 0.0
        %975 = vmatpush1.msra.mxu0 0.0
        %976 = vmatprep.subr.mxu0 0.0
        %977 = vmatpush1.msra.mxu0 0.0
        %978 = vmatprep.subr.mxu0 0.0
        %979 = vmatpush1.msra.mxu0 0.0
        %980 = vmatprep.subr.mxu0 0.0
        %981 = vmatpush1.msra.mxu0 0.0
        %982 = vmatprep.subr.mxu0 0.0
        %983 = vmatpush1.msra.mxu0 0.0
        %984 = vmatprep.subr.mxu0 0.0
        %985 = vmatpush1.msra.mxu0 0.0
        %986 = vmatprep.subr.mxu0 0.0
        %987 = vmatpush1.msra.mxu0 0.0
        %988 = vmatprep.subr.mxu0 0.0
        %989 = vmatpush1.msra.mxu0 0.0
        %990 = vmatprep.subr.mxu0 0.0
        %991 = vmatpush1.msra.mxu0 0.0
        %992 = vmatprep.subr.mxu0 0.0
        %993 = vmatpush1.msra.mxu0 0.0
        %994 = vmatprep.subr.mxu0 0.0
        %995 = vmatpush1.msra.mxu0 0.0
        %996 = vmatprep.subr.mxu0 0.0
        %997 = vmatpush1.msra.mxu0 0.0
        %998 = vmatprep.subr.mxu0 0.0
        %999 = vmatpush1.msra.mxu0 0.0
        %1000 = vmatprep.subr.mxu0 0.0
        %1001 = vmatpush1.msra.mxu0 0.0
        %1002 = vmatprep.subr.mxu0 0.0
        %1003 = vmatpush1.msra.mxu0 0.0
        %1004 = vmatprep.subr.mxu0 0.0
        %1005 = vmatpush1.msra.mxu0 0.0
        %1006 = vmatprep.subr.mxu0 0.0
        %1007 = vmatpush1.msra.mxu0 0.0
        %1008 = vmatprep.subr.mxu0 0.0
        %1009 = vmatpush1.msra.mxu0 0.0
        %1010 = vmatprep.subr.mxu0 0.0
        %1011 = vmatpush1.msra.mxu0 0.0
        %1012 = vmatprep.subr.mxu0 0.0
        %1013 = vmatpush1.msra.mxu0 0.0
        %1014 = vmatprep.subr.mxu0 0.0
        %1015 = vmatpush1.msra.mxu0 0.0
        %1016 = vmatprep.subr.mxu0 0.0
        %1017 = vmatpush1.msra.mxu0 0.0
        %1018 = vmatprep.subr.mxu0 0.0
        %1019 = vmatpush1.msra.mxu0 0.0
        %1020 = vmatprep.subr.mxu0 0.0
        %1021 = vmatpush1.msra.mxu0 0.0
        %1022 = vmatprep.subr.mxu0 0.0
        %1023 = vmatpush1.msra.mxu0 0.0
        %1024 = vmatprep.subr.mxu0 0.0
        %1025 = vmatpush1.msra.mxu0 0.0
        %1026 = vmatprep.subr.mxu0 0.0
        %1027 = vmatpush1.msra.mxu0 0.0
        %1028 = vmatprep.mubr.f32.mxu0 0.0
        %1029 = vmatmul.mubr.f32.gmra.mrb[0].mxu0 %v913
        %v1030 = vpop.f32.mrb[0].mxu0
        %v1031 = vadd.f32 0.0, %v1030
        %v1032 = vpop.f32.mrb[0].mxu0
        %1033 = vmatprep.mubr.f32.mxu0 0.0
        %1034 = vmatmul.mubr.f32.gmra.mrb[0].mxu0 %v916
        %v1035 = vpop.f32.mrb[0].mxu0
        %v1036 = vadd.f32 0.0, %v1035
        %v1037 = vpop.f32.mrb[0].mxu0
        %1038 = vmatprep.mubr.f32.mxu0 0.0
        %1039 = vmatmul.mubr.f32.gmra.mrb[0].mxu0 %v919
        %v1040 = vpop.f32.mrb[0].mxu0
        %v1041 = vadd.f32 0.0, %v1040
        %v1042 = vpop.f32.mrb[0].mxu0
        %1043 = vmatprep.mubr.f32.mxu0 0.0
        %1044 = vmatmul.mubr.f32.gmra.mrb[0].mxu0 %v922
        %v1045 = vpop.f32.mrb[0].mxu0
        %v1046 = vadd.f32 0.0, %v1045
        %v1047 = vpop.f32.mrb[0].mxu0
        %1048 = vmatprep.mubr.f32.mxu0 0.0
        %1049 = vmatmul.mubr.f32.gmra.mrb[0].mxu0 %v925
        %v1050 = vpop.f32.mrb[0].mxu0
        %v1051 = vadd.f32 0.0, %v1050
        %v1052 = vpop.f32.mrb[0].mxu0
        %1053 = vmatprep.mubr.f32.mxu0 0.0
        %1054 = vmatmul.mubr.f32.gmra.mrb[0].mxu0 %v928
        %v1055 = vpop.f32.mrb[0].mxu0
        %v1056 = vadd.f32 0.0, %v1055
        %v1057 = vpop.f32.mrb[0].mxu0
        %1058 = vmatprep.mubr.f32.mxu0 0.0
        %1059 = vmatmul.mubr.f32.gmra.mrb[0].mxu0 %v931
        %v1060 = vpop.f32.mrb[0].mxu0
        %v1061 = vadd.f32 0.0, %v1060
        %v1062 = vpop.f32.mrb[0].mxu0
        %1063 = vmatprep.mubr.f32.mxu0 0.0
        %1064 = vmatmul.mubr.f32.gmra.mrb[0].mxu0 %v934
        %v1065 = vpop.f32.mrb[0].mxu0
        %v1066 = vadd.f32 0.0, %v1065
        %v1067 = vpop.f32.mrb[0].mxu0
        %1068 = vmatprep.mubr.f32.mxu0 0.0
        %1069 = vmatmul.mubr.f32.gmra.mrb[0].mxu0 %v937
        %v1070 = vpop.f32.mrb[0].mxu0
        %v1071 = vadd.f32 0.0, %v1070
        %v1072 = vpop.f32.mrb[0].mxu0
        %1073 = vmatprep.mubr.f32.mxu0 0.0
        %1074 = vmatmul.mubr.f32.gmra.mrb[0].mxu0 %v940
        %v1075 = vpop.f32.mrb[0].mxu0
        %v1076 = vadd.f32 0.0, %v1075
        %v1077 = vpop.f32.mrb[0].mxu0
        %1078 = vmatprep.mubr.f32.mxu0 0.0
        %1079 = vmatmul.mubr.f32.gmra.mrb[0].mxu0 %v943
        %v1080 = vpop.f32.mrb[0].mxu0
        %v1081 = vadd.f32 0.0, %v1080
        %v1082 = vpop.f32.mrb[0].mxu0
        %1083 = vmatprep.mubr.f32.mxu0 0.0
        %1084 = vmatmul.mubr.f32.gmra.mrb[0].mxu0 %v946
        %v1085 = vpop.f32.mrb[0].mxu0
        %v1086 = vadd.f32 0.0, %v1085
        %v1087 = vpop.f32.mrb[0].mxu0
        %1088 = vmatprep.mubr.f32.mxu0 0.0
        %1089 = vmatmul.mubr.f32.gmra.mrb[0].mxu0 %v949
        %v1090 = vpop.f32.mrb[0].mxu0
        %v1091 = vadd.f32 0.0, %v1090
        %v1092 = vpop.f32.mrb[0].mxu0
        %1093 = vmatprep.mubr.f32.mxu0 0.0
        %1094 = vmatmul.mubr.f32.gmra.mrb[0].mxu0 %v952
        %v1095 = vpop.f32.mrb[0].mxu0
        %v1096 = vadd.f32 0.0, %v1095
        %v1097 = vpop.f32.mrb[0].mxu0
        %1098 = vmatprep.mubr.f32.mxu0 0.0
        %1099 = vmatmul.mubr.f32.gmra.mrb[0].mxu0 %v955
        %v1100 = vpop.f32.mrb[0].mxu0
        %v1101 = vadd.f32 0.0, %v1100
        %v1102 = vpop.f32.mrb[0].mxu0
        %1103 = vmatprep.mubr.f32.mxu0 0.0
        %1104 = vmatmul.mubr.f32.gmra.mrb[0].mxu0 %v958
        %v1105 = vpop.f32.mrb[0].mxu0
        %v1106 = vadd.f32 0.0, %v1105
        %v1107 = vpop.f32.mrb[0].mxu0
        %1108 = vdwg.mxu0
        %v1109 = vld [vmem:[%s2] sm:$0x1]
        %v1111 = vlaneseq
        %v1112 = vshrl.u32 %v1111, 7
        %v1113 = vsub.s32 0, %v1112
        %v1114 = vrot.slane %v1109, %v1113
        %v1116 = vmul.f32 %v1031, %v1114
        %v1117 = vmul.f32 %v1036, %v1114
        %v1118 = vmul.f32 %v1041, %v1114
        %v1119 = vmul.f32 %v1046, %v1114
        %v1120 = vmul.f32 %v1051, %v1114
        %v1121 = vmul.f32 %v1056, %v1114
        %v1122 = vmul.f32 %v1061, %v1114
        %v1123 = vmul.f32 %v1066, %v1114
        %v1124 = vmul.f32 %v1071, %v1114
        %v1125 = vmul.f32 %v1076, %v1114
        %v1126 = vmul.f32 %v1081, %v1114
        %v1127 = vmul.f32 %v1086, %v1114
        %v1128 = vmul.f32 %v1091, %v1114
        %v1129 = vmul.f32 %v1096, %v1114
        %v1130 = vmul.f32 %v1101, %v1114
        %v1131 = vmul.f32 %v1106, %v1114
        %v1132 = vld [vmem:[%s3] sm:$0x1]
        %v1134 = vlaneseq
        %v1135 = vshrl.u32 %v1134, 7
        %v1136 = vsub.s32 0, %v1135
        %v1137 = vrot.slane %v1132, %v1136
        %v1139 = vadd.f32 %v1116, %v1137
        %v1140 = vadd.f32 %v1117, %v1137
        %v1141 = vadd.f32 %v1118, %v1137
        %v1142 = vadd.f32 %v1119, %v1137
        %v1143 = vadd.f32 %v1120, %v1137
        %v1144 = vadd.f32 %v1121, %v1137
        %v1145 = vadd.f32 %v1122, %v1137
        %v1146 = vadd.f32 %v1123, %v1137
        %v1147 = vadd.f32 %v1124, %v1137
        %v1148 = vadd.f32 %v1125, %v1137
        %v1149 = vadd.f32 %v1126, %v1137
        %v1150 = vadd.f32 %v1127, %v1137
        %v1151 = vadd.f32 %v1128, %v1137
        %v1152 = vadd.f32 %v1129, %v1137
        %v1153 = vadd.f32 %v1130, %v1137
        %v1154 = vadd.f32 %v1131, %v1137
        %v1155 = vsub.f32 0.0, %v1139
        %v1156 = vsub.f32 0.0, %v1140
        %v1157 = vsub.f32 0.0, %v1141
        %v1158 = vsub.f32 0.0, %v1142
        %v1159 = vsub.f32 0.0, %v1143
        %v1160 = vsub.f32 0.0, %v1144
        %v1161 = vsub.f32 0.0, %v1145
        %v1162 = vsub.f32 0.0, %v1146
        %v1163 = vsub.f32 0.0, %v1147
        %v1164 = vsub.f32 0.0, %v1148
        %v1165 = vsub.f32 0.0, %v1149
        %v1166 = vsub.f32 0.0, %v1150
        %v1167 = vsub.f32 0.0, %v1151
        %v1168 = vsub.f32 0.0, %v1152
        %v1169 = vsub.f32 0.0, %v1153
        %v1170 = vsub.f32 0.0, %v1154
        %v1171 = vmul.f32 %v1155, 1.442695
        %v1172 = vpow.pop %v1171
        %v1173 = vmul.f32 %v1156, 1.442695
        %v1174 = vpow.pop %v1173
        %v1175 = vmul.f32 %v1157, 1.442695
        %v1176 = vpow.pop %v1175
        %v1177 = vmul.f32 %v1158, 1.442695
        %v1178 = vpow.pop %v1177
        %v1179 = vmul.f32 %v1159, 1.442695
        %v1180 = vpow.pop %v1179
        %v1181 = vmul.f32 %v1160, 1.442695
        %v1182 = vpow.pop %v1181
        %v1183 = vmul.f32 %v1161, 1.442695
        %v1184 = vpow.pop %v1183
        %v1185 = vmul.f32 %v1162, 1.442695
        %v1186 = vpow.pop %v1185
        %v1187 = vmul.f32 %v1163, 1.442695
        %v1188 = vpow.pop %v1187
        %v1189 = vmul.f32 %v1164, 1.442695
        %v1190 = vpow.pop %v1189
        %v1191 = vmul.f32 %v1165, 1.442695
        %v1192 = vpow.pop %v1191
        %v1193 = vmul.f32 %v1166, 1.442695
        %v1194 = vpow.pop %v1193
        %v1195 = vmul.f32 %v1167, 1.442695
        %v1196 = vpow.pop %v1195
        %v1197 = vmul.f32 %v1168, 1.442695
        %v1198 = vpow.pop %v1197
        %v1199 = vmul.f32 %v1169, 1.442695
        %v1200 = vpow.pop %v1199
        %v1201 = vmul.f32 %v1170, 1.442695
        %v1202 = vpow.pop %v1201
        %v1203 = vadd.f32 %v1172, 1.0
        %v1204 = vadd.f32 %v1174, 1.0
        %v1205 = vadd.f32 %v1176, 1.0
        %v1206 = vadd.f32 %v1178, 1.0
        %v1207 = vadd.f32 %v1180, 1.0
        %v1208 = vadd.f32 %v1182, 1.0
        %v1209 = vadd.f32 %v1184, 1.0
        %v1210 = vadd.f32 %v1186, 1.0
        %v1211 = vadd.f32 %v1188, 1.0
        %v1212 = vadd.f32 %v1190, 1.0
        %v1213 = vadd.f32 %v1192, 1.0
        %v1214 = vadd.f32 %v1194, 1.0
        %v1215 = vadd.f32 %v1196, 1.0
        %v1216 = vadd.f32 %v1198, 1.0
        %v1217 = vadd.f32 %v1200, 1.0
        %v1218 = vadd.f32 %v1202, 1.0
        %v1219 = vrcp.pop %v1203
        %v1220 = vrcp.pop %v1204
        %v1221 = vrcp.pop %v1205
        %v1222 = vrcp.pop %v1206
        %v1223 = vrcp.pop %v1207
        %v1224 = vrcp.pop %v1208
        %v1225 = vrcp.pop %v1209
        %v1226 = vrcp.pop %v1210
        %v1227 = vrcp.pop %v1211
        %v1228 = vrcp.pop %v1212
        %v1229 = vrcp.pop %v1213
        %v1230 = vrcp.pop %v1214
        %v1231 = vrcp.pop %v1215
        %v1232 = vrcp.pop %v1216
        %v1233 = vrcp.pop %v1217
        %v1234 = vrcp.pop %v1218
        %v1235 = vmul.f32 %v1139, %v1219
        %v1236 = vmul.f32 %v1140, %v1220
        %v1237 = vmul.f32 %v1141, %v1221
        %v1238 = vmul.f32 %v1142, %v1222
        %v1239 = vmul.f32 %v1143, %v1223
        %v1240 = vmul.f32 %v1144, %v1224
        %v1241 = vmul.f32 %v1145, %v1225
        %v1242 = vmul.f32 %v1146, %v1226
        %v1243 = vmul.f32 %v1147, %v1227
        %v1244 = vmul.f32 %v1148, %v1228
        %v1245 = vmul.f32 %v1149, %v1229
        %v1246 = vmul.f32 %v1150, %v1230
        %v1247 = vmul.f32 %v1151, %v1231
        %v1248 = vmul.f32 %v1152, %v1232
        %v1249 = vmul.f32 %v1153, %v1233
        %v1250 = vmul.f32 %v1154, %v1234
        %1251 = vst [vmem:[%s214] sm:$0xff] %v1235
        %1252 = vst [vmem:[%s214 + $0x8] sm:$0xff] %v1236
        %1253 = vst [vmem:[%s214 + $0x10] sm:$0xff] %v1237
        %1254 = vst [vmem:[%s214 + $0x18] sm:$0xff] %v1238
        %1255 = vst [vmem:[%s214 + $0x20] sm:$0xff] %v1239
        %1256 = vst [vmem:[%s214 + $0x28] sm:$0xff] %v1240
        %1257 = vst [vmem:[%s214 + $0x30] sm:$0xff] %v1241
        %1258 = vst [vmem:[%s214 + $0x38] sm:$0xff] %v1242
        %1259 = vst [vmem:[%s214 + $0x40] sm:$0xff] %v1243
        %1260 = vst [vmem:[%s214 + $0x48] sm:$0xff] %v1244
        %1261 = vst [vmem:[%s214 + $0x50] sm:$0xff] %v1245
        %1262 = vst [vmem:[%s214 + $0x58] sm:$0xff] %v1246
        %1263 = vst [vmem:[%s214 + $0x60] sm:$0xff] %v1247
        %1264 = vst [vmem:[%s214 + $0x68] sm:$0xff] %v1248
        %1265 = vst [vmem:[%s214 + $0x70] sm:$0xff] %v1249
        %1266 = vst [vmem:[%s214 + $0x78] sm:$0xff] %v1250
        %s1267 = sand.u32 %s131, 1
        %s1268 = scalar_lea.sflag [#allocation3], %s1267
        %s1269 = sand.u32 %s131, 1
        %s1270 = smul.addr %s1269, 128
        %s1271 = scalar_lea.vmem [#allocation2], %s1270
        // Predicated region
        $region37: #{tpu_custom_call.1} parent=35 // pred_check
          %p1272 = pneg %p141
        $region38: #{tpu_custom_call.1} parent=35 // pred_check_branch
          %1274 = sbr.rel (%p1272) target = $region40
        $region39: #{tpu_custom_call.1} parent=35 // pred_region
          %s1276 = ssub.s32 2048, 2048
          %1277 = vsyncadd %s1268, %s1276
          %s1278 = smul.addr %s23, 16
          %s1279 = smul.addr %s22, 32
          %s1280 = sadd.s32 %s1278, %s1279
          %s1281 = smul.addr %s1280, 128
          %s1282 = scalar_lea.hbm %s4, %s1281
          %s1283 = sshll.u32 %s1271, 4
          %s1284 = int_to_ptr.vmem [resolvable:$true] %s1283
          %1289 = dma.vmem_to_hbm [thread:$0]  %s1284, 2048, %s1282, %s1268, 128, 128, 8
        $region40: #{tpu_custom_call.1} parent=35 // pred_fallthru
          _
      $region36: #{tpu_custom_call.1} parent=5 // pred_fallthru
        _
      %p1290 = scmp.le.s32.totalorder 2, %s13
      // Predicated region
      $region41: #{tpu_custom_call.1} parent=5 // pred_check
        %p1291 = pneg %p1290
      $region42: #{tpu_custom_call.1} parent=5 // pred_check_branch
        %1293 = sbr.rel (%p1291) target = $region44
      $region43: #{tpu_custom_call.1} parent=5 // pred_region
        %s1294 = ssub.s32 %s13, 2
        // Predicated region
        $region45: #{tpu_custom_call.1} parent=43 // pred_check
          %p1295 = pneg %p147
        $region46: #{tpu_custom_call.1} parent=43 // pred_check_branch
          %1297 = sbr.rel (%p1295) target = $region48
        $region47: #{tpu_custom_call.1} parent=43 // pred_region
          %s1298 = sand.u32 %s132, 1
          %s1299 = scalar_lea.sflag [#allocation3], %s1298
          %s1300 = sand.u32 %s132, 1
          %s1301 = smul.addr %s1300, 128
          %s1302 = scalar_lea.vmem [#allocation2], %s1301
          %1303 = dma.done %s1299, 2048
        $region48: #{tpu_custom_call.1} parent=43 // pred_fallthru
          _
      $region44: #{tpu_custom_call.1} parent=5 // pred_fallthru
        _
    $region6: #{tpu_custom_call.1} parent=1 // loop_footer
      %s17 = sadd.s32 1, %s13
    $region7: #{tpu_custom_call.1} parent=1 // loop_footer_branch
      %12 = sbr.rel target = $region3
    $region8: #{tpu_custom_call.1} parent=1 // loop_exit
      _
    %1304 = vsyncpa [#allocation3], 1
    %s1305 = scalar_lea.sflag [#allocation3], 1
    %1306 = vsyncpa %s1305, 1

// kernel: tpu_custom_call.1
$region0: #{tpu_custom_call.1}
  #allocation0 [shape = 'u32[]', space=smem, size = 0x4, offset = 0x4, fixed_abs, tag = 'smem constant byte address 0x4 - core index']
  #allocation1 [shape = 'u32[144,128]{1,0:T(1,128)}', space=vmem, size = 0x12000, scoped, tag = 'internal scratch']
  %s0 = inlined_call_operand.vmem [shape: f32[2,2,10,18,4], index: 0, kind: input, shape index: {}]
  %s1 = inlined_call_operand.vmem [shape: f32[36,128], index: 1, kind: input, shape index: {}]
  %s2 = inlined_call_operand.vmem [shape: f32[1,128], index: 2, kind: input, shape index: {}]
  %s3 = inlined_call_operand.vmem [shape: f32[1,128], index: 3, kind: input, shape index: {}]
  %s4 = inlined_call_operand.hbm [shape: f32[2,2,128,128], index: 4, kind: output, shape index: {}]
  %s5 = sld [smem:[#allocation0]]
  $region49: #{tpu_custom_call.1} parent=0
    _
  %s7 = ssub.s32 1, %s5
  %s8 = scalar_select 0, %s7, %s5
  $region1: #{tpu_custom_call.1} parent=0
    #allocation2 [shape = 'u8[131072]{0}', space=vmem, size = 0x20000, scoped, tag = 'output window, operand 0']
    #allocation3 [shape = 's32[2]{0}', space=sflag, size = 0x8, scoped, tag = 'scoped memory for tpu_custom_call.1']
    %9 = vsyncpa [#allocation3], 0
    %s10 = scalar_lea.sflag [#allocation3], 1
    %11 = vsyncpa %s10, 0
    loop: start=0, step=1, limit=6
    $region2: #{tpu_custom_call.1} parent=1 // loop_pre_header
      _
    $region3: #{tpu_custom_call.1} parent=1 // loop_header
      %s13 = sphi 0, %s17
      %p14 = scmp.ge.s32.totalorder %s13, 6
      %s20 = sphi 0, %s32
      %s21 = sphi 0, %s28
      %s22 = sphi 0, %s20
      %s23 = sphi 0, %s21
      %s24 = sphi 0, %s22
      %s25 = sphi 0, %s23
      %s37 = sphi 0, %s39
      %s40 = sphi 0, %s37
      %s41 = sphi 0, %s40
      %s57 = sphi 0, %s41
      %s61 = sphi 0, %s61
      %s63 = sphi 0, %s61
      %s64 = sphi 0, %s63
      %s78 = sphi 0, %s64
      %s82 = sphi 0, %s82
      %s84 = sphi 0, %s82
      %s85 = sphi 0, %s84
      %s99 = sphi 0, %s85
      %s103 = sphi 0, %s103
      %s105 = sphi 0, %s103
      %s106 = sphi 0, %s105
      %s120 = sphi 0, %s106
      %s128 = sphi 0, %s130
      %s131 = sphi 0, %s128
      %s132 = sphi 0, %s131
      %s148 = sphi 0, %s132
    $region4: #{tpu_custom_call.1} parent=1 // loop_header_branch
      %16 = sbr.rel (%p14) target = $region8
    $region5: #{tpu_custom_call.1} parent=1 // loop_body
      %s18 = ssub.s32 %s13, 1
      %s19 = ssub.s32 %s13, 2
      %s26 = sadd.s32 1, %s21
      %p27 = scmp.ge.s32.totalorder %s26, 2
      %s28 = scalar_select %p27, 0, %s26
      %s29 = sadd.s32 1, %s20
      %s30 = scalar_select %p27, %s29, %s20
      %p31 = scmp.ge.s32.totalorder %s30, 2
      %s32 = scalar_select %p31, 0, %s30
      %s33 = ssub.s32 %s20, %s32
      %s34 = ssub.s32 %s21, %s28
      %s35 = sor.u32 %s33, %s34
      %p36 = scmp.eq.s32.totalorder %s35, 0
      %s38 = sadd.s32 %s37, 1
      %s39 = scalar_select %p36, %s37, %s38
      %p42 = pneg %p36
      %p43 = scmp.eq.s32.totalorder %s13, 3
      %p44 = por %p42, %p43
      %p45 = scmp.ne.s32.totalorder %s37, %s40
      %p46 = scmp.eq.s32.totalorder %s13, 0
      %p47 = por %p45, %p46
      %p48 = scmp.ne.s32.totalorder %s37, %s40
      %p49 = scmp.eq.s32.totalorder %s18, 3
      %p50 = por %p48, %p49
      %p51 = scmp.ne.s32.totalorder %s40, %s41
      %p52 = scmp.eq.s32.totalorder %s18, 0
      %p53 = por %p51, %p52
      %p54 = scmp.ne.s32.totalorder %s40, %s41
      %p55 = scmp.eq.s32.totalorder %s19, 3
      %p56 = por %p54, %p55
      %p58 = scmp.ne.s32.totalorder %s41, %s57
      %p59 = scmp.eq.s32.totalorder %s19, 0
      %p60 = por %p58, %p59
      %s62 = sadd.s32 %s61, 1
      %p65 = scmp.eq.s32.totalorder %s13, 3
      %p66 = scmp.ne.s32.totalorder %s61, %s63
      %p67 = scmp.eq.s32.totalorder %s13, 0
      %p68 = por %p66, %p67
      %p69 = scmp.ne.s32.totalorder %s61, %s63
      %p70 = scmp.eq.s32.totalorder %s18, 3
      %p71 = por %p69, %p70
      %p72 = scmp.ne.s32.totalorder %s63, %s64
      %p73 = scmp.eq.s32.totalorder %s18, 0
      %p74 = por %p72, %p73
      %p75 = scmp.ne.s32.totalorder %s63, %s64
      %p76 = scmp.eq.s32.totalorder %s19, 3
      %p77 = por %p75, %p76
      %p79 = scmp.ne.s32.totalorder %s64, %s78
      %p80 = scmp.eq.s32.totalorder %s19, 0
      %p81 = por %p79, %p80
      %s83 = sadd.s32 %s82, 1
      %p86 = scmp.eq.s32.totalorder %s13, 3
      %p87 = scmp.ne.s32.totalorder %s82, %s84
      %p88 = scmp.eq.s32.totalorder %s13, 0
      %p89 = por %p87, %p88
      %p90 = scmp.ne.s32.totalorder %s82, %s84
      %p91 = scmp.eq.s32.totalorder %s18, 3
      %p92 = por %p90, %p91
      %p93 = scmp.ne.s32.totalorder %s84, %s85
      %p94 = scmp.eq.s32.totalorder %s18, 0
      %p95 = por %p93, %p94
      %p96 = scmp.ne.s32.totalorder %s84, %s85
      %p97 = scmp.eq.s32.totalorder %s19, 3
      %p98 = por %p96, %p97
      %p100 = scmp.ne.s32.totalorder %s85, %s99
      %p101 = scmp.eq.s32.totalorder %s19, 0
      %p102 = por %p100, %p101
      %s104 = sadd.s32 %s103, 1
      %p107 = scmp.eq.s32.totalorder %s13, 3
      %p108 = scmp.ne.s32.totalorder %s103, %s105
      %p109 = scmp.eq.s32.totalorder %s13, 0
      %p110 = por %p108, %p109
      %p111 = scmp.ne.s32.totalorder %s103, %s105
      %p112 = scmp.eq.s32.totalorder %s18, 3
      %p113 = por %p111, %p112
      %p114 = scmp.ne.s32.totalorder %s105, %s106
      %p115 = scmp.eq.s32.totalorder %s18, 0
      %p116 = por %p114, %p115
      %p117 = scmp.ne.s32.totalorder %s105, %s106
      %p118 = scmp.eq.s32.totalorder %s19, 3
      %p119 = por %p117, %p118
      %p121 = scmp.ne.s32.totalorder %s106, %s120
      %p122 = scmp.eq.s32.totalorder %s19, 0
      %p123 = por %p121, %p122
      %s124 = ssub.s32 %s20, %s32
      %s125 = ssub.s32 %s21, %s28
      %s126 = sor.u32 %s124, %s125
      %p127 = scmp.eq.s32.totalorder %s126, 0
      %s129 = sadd.s32 %s128, 1
      %s130 = scalar_select %p127, %s128, %s129
      %p133 = pneg %p127
      %p134 = scmp.eq.s32.totalorder %s13, 3
      %p135 = por %p133, %p134
      %p136 = scmp.ne.s32.totalorder %s128, %s131
      %p137 = scmp.eq.s32.totalorder %s13, 0
      %p138 = por %p136, %p137
      %p139 = scmp.ne.s32.totalorder %s128, %s131
      %p140 = scmp.eq.s32.totalorder %s18, 3
      %p141 = por %p139, %p140
      %p142 = scmp.ne.s32.totalorder %s131, %s132
      %p143 = scmp.eq.s32.totalorder %s18, 0
      %p144 = por %p142, %p143
      %p145 = scmp.ne.s32.totalorder %s131, %s132
      %p146 = scmp.eq.s32.totalorder %s19, 3
      %p147 = por %p145, %p146
      %p149 = scmp.ne.s32.totalorder %s132, %s148
      %p150 = scmp.eq.s32.totalorder %s19, 0
      %p151 = por %p149, %p150
      %p152 = scmp.le.s32.totalorder 1, %s13
      %p153 = scmp.lt.s32.totalorder %s13, 5
      %p154 = pnand %p152, %p153
      %p155 = pneg %p154
      // Predicated region
      $region9: #{tpu_custom_call.1} parent=5 // pred_check
        _
      $region10: #{tpu_custom_call.1} parent=5 // pred_check_branch
        %157 = sbr.rel (%p154) target = $region12
      $region11: #{tpu_custom_call.1} parent=5 // pred_region
        %s158 = ssub.s32 %s13, 1
        // Predicated region
        $region13: #{tpu_custom_call.1} parent=11 // pred_check
          %p159 = pneg %p74
        $region14: #{tpu_custom_call.1} parent=11 // pred_check_branch
          %161 = sbr.rel (%p159) target = $region16
        $region15: #{tpu_custom_call.1} parent=11 // pred_region
          _
        $region16: #{tpu_custom_call.1} parent=11 // pred_fallthru
          _
        // Predicated region
        $region17: #{tpu_custom_call.1} parent=11 // pred_check
          %p162 = pneg %p95
        $region18: #{tpu_custom_call.1} parent=11 // pred_check_branch
          %164 = sbr.rel (%p162) target = $region20
        $region19: #{tpu_custom_call.1} parent=11 // pred_region
          _
        $region20: #{tpu_custom_call.1} parent=11 // pred_fallthru
          _
        // Predicated region
        $region21: #{tpu_custom_call.1} parent=11 // pred_check
          %p165 = pneg %p116
        $region22: #{tpu_custom_call.1} parent=11 // pred_check_branch
          %167 = sbr.rel (%p165) target = $region24
        $region23: #{tpu_custom_call.1} parent=11 // pred_region
          _
        $region24: #{tpu_custom_call.1} parent=11 // pred_fallthru
          _
      $region12: #{tpu_custom_call.1} parent=5 // pred_fallthru
        _
      %p168 = scmp.lt.s32.totalorder %s13, 4
      // Predicated region
      $region25: #{tpu_custom_call.1} parent=5 // pred_check
        %p169 = pneg %p168
      $region26: #{tpu_custom_call.1} parent=5 // pred_check_branch
        %171 = sbr.rel (%p169) target = $region28
      $region27: #{tpu_custom_call.1} parent=5 // pred_region
        // Predicated region
        $region29: #{tpu_custom_call.1} parent=27 // pred_check
          %p172 = pneg %p47
        $region30: #{tpu_custom_call.1} parent=27 // pred_check_branch
          %174 = sbr.rel (%p172) target = $region32
        $region31: #{tpu_custom_call.1} parent=27 // pred_region
          %p175 = scmp.lt.s32.totalorder %s20, 1
          %s176 = scalar_select %p175, %s20, 1
          %p177 = scmp.lt.s32.totalorder %s21, 1
          %s178 = scalar_select %p177, %s21, 1
          %s179 = smul.addr %s178, 30
          %s180 = smul.addr %s176, 60
          %s181 = sadd.s32 %s179, %s180
          %s182 = smul.addr %s181, 8
          %s183 = scalar_lea.vmem %s0, %s182
        $region32: #{tpu_custom_call.1} parent=27 // pred_fallthru
          _
      $region28: #{tpu_custom_call.1} parent=5 // pred_fallthru
        _
      %p184 = scmp.le.s32.totalorder 1, %s13
      %p185 = scmp.lt.s32.totalorder %s13, 5
      %p186 = pnand %p184, %p185
      %p187 = pneg %p186
      // Predicated region
      $region33: #{tpu_custom_call.1} parent=5 // pred_check
        _
      $region34: #{tpu_custom_call.1} parent=5 // pred_check_branch
        %189 = sbr.rel (%p186) target = $region36
      $region35: #{tpu_custom_call.1} parent=5 // pred_region
        %s190 = ssub.s32 %s13, 1
        %p191 = scmp.lt.s32.totalorder %s22, 1
        %s192 = scalar_select %p191, %s22, 1
        %p193 = scmp.lt.s32.totalorder %s23, 1
        %s194 = scalar_select %p193, %s23, 1
        %s195 = smul.addr %s194, 30
        %s196 = smul.addr %s192, 60
        %s197 = sadd.s32 %s195, %s196
        %s198 = smul.addr %s197, 8
        %s199 = scalar_lea.vmem %s0, %s198
        %p200 = pneg %p53
        %p201 = pneg %p50
        %p202 = pneg %p74
        %p203 = pneg %p71
        %p204 = pneg %p95
        %p205 = pneg %p92
        %p206 = pneg %p116
        %p207 = pneg %p113
        %p208 = pneg %p144
        %p209 = pneg %p141
        %s210 = sand.u32 %s131, 1
        %s211 = scalar_lea.sflag [#allocation3], %s210
        %s212 = sand.u32 %s131, 1
        %s213 = smul.addr %s212, 128
        %s214 = scalar_lea.vmem [#allocation2], %s213
        %p215 = scmp.lt.s32.totalorder %s22, 1
        %s216 = scalar_select %p215, %s22, 1
        %p217 = scmp.lt.s32.totalorder %s23, 1
        %s218 = scalar_select %p217, %s23, 1
        %s219 = smul.addr %s218, 30
        %s220 = smul.addr %s216, 60
        %s221 = sadd.s32 %s219, %s220
        %s222 = smul.addr %s221, 8
        %s223 = scalar_lea.vmem %s0, %s222
        %v224 = vld [vmem:[%s223] sm:$0xff]
        %v225 = vld [vmem:[%s223 + $0x8] sm:$0xff]
        %v226 = vld [vmem:[%s223 + $0x10] sm:$0x3]
        %v227 = vld [vmem:[%s223 + $0x18] sm:$0xff]
        %v228 = vld [vmem:[%s223 + $0x20] sm:$0xff]
        %v229 = vld [vmem:[%s223 + $0x28] sm:$0x3]
        %v230 = vld [vmem:[%s223 + $0x30] sm:$0xff]
        %v231 = vld [vmem:[%s223 + $0x38] sm:$0xff]
        %v232 = vld [vmem:[%s223 + $0x40] sm:$0x3]
        %v233 = vld [vmem:[%s223 + $0x48] sm:$0xff]
        %v234 = vld [vmem:[%s223 + $0x50] sm:$0xff]
        %v235 = vld [vmem:[%s223 + $0x58] sm:$0x3]
        %v236 = vld [vmem:[%s223 + $0x60] sm:$0xff]
        %v237 = vld [vmem:[%s223 + $0x68] sm:$0xff]
        %v238 = vld [vmem:[%s223 + $0x70] sm:$0x3]
        %v239 = vld [vmem:[%s223 + $0x78] sm:$0xff]
        %v240 = vld [vmem:[%s223 + $0x80] sm:$0xff]
        %v241 = vld [vmem:[%s223 + $0x88] sm:$0x3]
        %v242 = vld [vmem:[%s223 + $0x90] sm:$0xff]
        %v243 = vld [vmem:[%s223 + $0x98] sm:$0xff]
        %v244 = vld [vmem:[%s223 + $0xa0] sm:$0x3]
        %v245 = vld [vmem:[%s223 + $0xa8] sm:$0xff]
        %v246 = vld [vmem:[%s223 + $0xb0] sm:$0xff]
        %v247 = vld [vmem:[%s223 + $0xb8] sm:$0x3]
        %v248 = vld [vmem:[%s223 + $0xc0] sm:$0xff]
        %v249 = vld [vmem:[%s223 + $0xc8] sm:$0xff]
        %v250 = vld [vmem:[%s223 + $0xd0] sm:$0x3]
        %v251 = vld [vmem:[%s223 + $0xd8] sm:$0xff]
        %v252 = vld [vmem:[%s223 + $0xe0] sm:$0xff]
        %v253 = vld [vmem:[%s223 + $0xe8] sm:$0x3]
        %vm278 = vcmask 1046528
        %v279 = vrot.slane %v224, 1
        %v280 = vrot.slane %v225, 1
        %v281 = vsel %vm278, %v279, %v280
        %v282 = vrot.slane %v226, 1
        %v283 = vsel %vm278, %v280, %v282
        %v284 = vrot.slane %v227, 1
        %v285 = vrot.slane %v228, 1
        %v286 = vsel %vm278, %v284, %v285
        %v287 = vrot.slane %v229, 1
        %v288 = vsel %vm278, %v285, %v287
        %v289 = vrot.slane %v230, 1
        %v290 = vrot.slane %v231, 1
        %v291 = vsel %vm278, %v289, %v290
        %v292 = vrot.slane %v232, 1
        %v293 = vsel %vm278, %v290, %v292
        %v294 = vrot.slane %v233, 1
        %v295 = vrot.slane %v234, 1
        %v296 = vsel %vm278, %v294, %v295
        %v297 = vrot.slane %v235, 1
        %v298 = vsel %vm278, %v295, %v297
        %v299 = vrot.slane %v236, 1
        %v300 = vrot.slane %v237, 1
        %v301 = vsel %vm278, %v299, %v300
        %v302 = vrot.slane %v238, 1
        %v303 = vsel %vm278, %v300, %v302
        %v304 = vrot.slane %v239, 1
        %v305 = vrot.slane %v240, 1
        %v306 = vsel %vm278, %v304, %v305
        %v307 = vrot.slane %v241, 1
        %v308 = vsel %vm278, %v305, %v307
        %v309 = vrot.slane %v242, 1
        %v310 = vrot.slane %v243, 1
        %v311 = vsel %vm278, %v309, %v310
        %v312 = vrot.slane %v244, 1
        %v313 = vsel %vm278, %v310, %v312
        %v314 = vrot.slane %v245, 1
        %v315 = vrot.slane %v246, 1
        %v316 = vsel %vm278, %v314, %v315
        %v317 = vrot.slane %v247, 1
        %v318 = vsel %vm278, %v315, %v317
        %vm319 = vcmask 1045504
        %v320 = vrot.slane %v224, 2
        %v321 = vrot.slane %v225, 2
        %v322 = vsel %vm319, %v320, %v321
        %v323 = vrot.slane %v226, 2
        %v324 = vsel %vm319, %v321, %v323
        %v325 = vrot.slane %v227, 2
        %v326 = vrot.slane %v228, 2
        %v327 = vsel %vm319, %v325, %v326
        %v328 = vrot.slane %v229, 2
        %v329 = vsel %vm319, %v326, %v328
        %v330 = vrot.slane %v230, 2
        %v331 = vrot.slane %v231, 2
        %v332 = vsel %vm319, %v330, %v331
        %v333 = vrot.slane %v232, 2
        %v334 = vsel %vm319, %v331, %v333
        %v335 = vrot.slane %v233, 2
        %v336 = vrot.slane %v234, 2
        %v337 = vsel %vm319, %v335, %v336
        %v338 = vrot.slane %v235, 2
        %v339 = vsel %vm319, %v336, %v338
        %v340 = vrot.slane %v236, 2
        %v341 = vrot.slane %v237, 2
        %v342 = vsel %vm319, %v340, %v341
        %v343 = vrot.slane %v238, 2
        %v344 = vsel %vm319, %v341, %v343
        %v345 = vrot.slane %v239, 2
        %v346 = vrot.slane %v240, 2
        %v347 = vsel %vm319, %v345, %v346
        %v348 = vrot.slane %v241, 2
        %v349 = vsel %vm319, %v346, %v348
        %v350 = vrot.slane %v242, 2
        %v351 = vrot.slane %v243, 2
        %v352 = vsel %vm319, %v350, %v351
        %v353 = vrot.slane %v244, 2
        %v354 = vsel %vm319, %v351, %v353
        %v355 = vrot.slane %v245, 2
        %v356 = vrot.slane %v246, 2
        %v357 = vsel %vm319, %v355, %v356
        %v358 = vrot.slane %v247, 2
        %v359 = vsel %vm319, %v356, %v358
        %v363 = vrot.slane %v248, 1
        %v364 = vrot.slane %v249, 1
        %v365 = vsel %vm278, %v363, %v364
        %v366 = vrot.slane %v250, 1
        %v367 = vsel %vm278, %v364, %v366
        %v368 = vrot.slane %v248, 2
        %v369 = vrot.slane %v249, 2
        %v370 = vsel %vm319, %v368, %v369
        %v371 = vrot.slane %v250, 2
        %v372 = vsel %vm319, %v369, %v371
        %v376 = vrot.slane %v251, 1
        %v377 = vrot.slane %v252, 1
        %v378 = vsel %vm278, %v376, %v377
        %v379 = vrot.slane %v253, 1
        %v380 = vsel %vm278, %v377, %v379
        %v381 = vrot.slane %v251, 2
        %v382 = vrot.slane %v252, 2
        %v383 = vsel %vm319, %v381, %v382
        %v384 = vrot.slane %v253, 2
        %v385 = vsel %vm319, %v382, %v384
        %386 = vrot.lane.b32.xlu0 %v281, 4
        %v387 = vpop.permute.xlu0 %386
        %388 = vrot.lane.b32.xlu0 %v283, 4
        %v389 = vpop.permute.xlu0 %388
        %390 = vrot.lane.b32.xlu0 %v286, 4
        %v391 = vpop.permute.xlu0 %390
        %392 = vrot.lane.b32.xlu0 %v288, 4
        %v393 = vpop.permute.xlu0 %392
        %394 = vrot.lane.b32.xlu0 %v291, 4
        %v395 = vpop.permute.xlu0 %394
        %396 = vrot.lane.b32.xlu0 %v293, 4
        %v397 = vpop.permute.xlu0 %396
        %398 = vrot.lane.b32.xlu0 %v296, 4
        %v399 = vpop.permute.xlu0 %398
        %400 = vrot.lane.b32.xlu0 %v298, 4
        %v401 = vpop.permute.xlu0 %400
        %402 = vrot.lane.b32.xlu0 %v301, 4
        %v403 = vpop.permute.xlu0 %402
        %404 = vrot.lane.b32.xlu0 %v303, 4
        %v405 = vpop.permute.xlu0 %404
        %406 = vrot.lane.b32.xlu0 %v306, 4
        %v407 = vpop.permute.xlu0 %406
        %408 = vrot.lane.b32.xlu0 %v308, 4
        %v409 = vpop.permute.xlu0 %408
        %410 = vrot.lane.b32.xlu0 %v311, 4
        %v411 = vpop.permute.xlu0 %410
        %412 = vrot.lane.b32.xlu0 %v313, 4
        %v413 = vpop.permute.xlu0 %412
        %414 = vrot.lane.b32.xlu0 %v316, 4
        %v415 = vpop.permute.xlu0 %414
        %416 = vrot.lane.b32.xlu0 %v318, 4
        %v417 = vpop.permute.xlu0 %416
        %434 = vrot.lane.b32.xlu0 %v322, 8
        %v435 = vpop.permute.xlu0 %434
        %436 = vrot.lane.b32.xlu0 %v324, 8
        %v437 = vpop.permute.xlu0 %436
        %438 = vrot.lane.b32.xlu0 %v327, 8
        %v439 = vpop.permute.xlu0 %438
        %440 = vrot.lane.b32.xlu0 %v329, 8
        %v441 = vpop.permute.xlu0 %440
        %442 = vrot.lane.b32.xlu0 %v332, 8
        %v443 = vpop.permute.xlu0 %442
        %444 = vrot.lane.b32.xlu0 %v334, 8
        %v445 = vpop.permute.xlu0 %444
        %446 = vrot.lane.b32.xlu0 %v337, 8
        %v447 = vpop.permute.xlu0 %446
        %448 = vrot.lane.b32.xlu0 %v339, 8
        %v449 = vpop.permute.xlu0 %448
        %450 = vrot.lane.b32.xlu0 %v342, 8
        %v451 = vpop.permute.xlu0 %450
        %452 = vrot.lane.b32.xlu0 %v344, 8
        %v453 = vpop.permute.xlu0 %452
        %454 = vrot.lane.b32.xlu0 %v347, 8
        %v455 = vpop.permute.xlu0 %454
        %456 = vrot.lane.b32.xlu0 %v349, 8
        %v457 = vpop.permute.xlu0 %456
        %458 = vrot.lane.b32.xlu0 %v352, 8
        %v459 = vpop.permute.xlu0 %458
        %460 = vrot.lane.b32.xlu0 %v354, 8
        %v461 = vpop.permute.xlu0 %460
        %462 = vrot.lane.b32.xlu0 %v357, 8
        %v463 = vpop.permute.xlu0 %462
        %464 = vrot.lane.b32.xlu0 %v359, 8
        %v465 = vpop.permute.xlu0 %464
        %482 = vrot.lane.b32.xlu0 %v227, 12
        %v483 = vpop.permute.xlu0 %482
        %484 = vrot.lane.b32.xlu0 %v228, 12
        %v485 = vpop.permute.xlu0 %484
        %486 = vrot.lane.b32.xlu0 %v230, 12
        %v487 = vpop.permute.xlu0 %486
        %488 = vrot.lane.b32.xlu0 %v231, 12
        %v489 = vpop.permute.xlu0 %488
        %490 = vrot.lane.b32.xlu0 %v233, 12
        %v491 = vpop.permute.xlu0 %490
        %492 = vrot.lane.b32.xlu0 %v234, 12
        %v493 = vpop.permute.xlu0 %492
        %494 = vrot.lane.b32.xlu0 %v236, 12
        %v495 = vpop.permute.xlu0 %494
        %496 = vrot.lane.b32.xlu0 %v237, 12
        %v497 = vpop.permute.xlu0 %496
        %498 = vrot.lane.b32.xlu0 %v239, 12
        %v499 = vpop.permute.xlu0 %498
        %500 = vrot.lane.b32.xlu0 %v240, 12
        %v501 = vpop.permute.xlu0 %500
        %502 = vrot.lane.b32.xlu0 %v242, 12
        %v503 = vpop.permute.xlu0 %502
        %504 = vrot.lane.b32.xlu0 %v243, 12
        %v505 = vpop.permute.xlu0 %504
        %506 = vrot.lane.b32.xlu0 %v245, 12
        %v507 = vpop.permute.xlu0 %506
        %508 = vrot.lane.b32.xlu0 %v246, 12
        %v509 = vpop.permute.xlu0 %508
        %510 = vrot.lane.b32.xlu0 %v248, 12
        %v511 = vpop.permute.xlu0 %510
        %512 = vrot.lane.b32.xlu0 %v249, 12
        %v513 = vpop.permute.xlu0 %512
        %530 = vrot.lane.b32.xlu0 %v286, 16
        %v531 = vpop.permute.xlu0 %530
        %532 = vrot.lane.b32.xlu0 %v288, 16
        %v533 = vpop.permute.xlu0 %532
        %534 = vrot.lane.b32.xlu0 %v291, 16
        %v535 = vpop.permute.xlu0 %534
        %536 = vrot.lane.b32.xlu0 %v293, 16
        %v537 = vpop.permute.xlu0 %536
        %538 = vrot.lane.b32.xlu0 %v296, 16
        %v539 = vpop.permute.xlu0 %538
        %540 = vrot.lane.b32.xlu0 %v298, 16
        %v541 = vpop.permute.xlu0 %540
        %542 = vrot.lane.b32.xlu0 %v301, 16
        %v543 = vpop.permute.xlu0 %542
        %544 = vrot.lane.b32.xlu0 %v303, 16
        %v545 = vpop.permute.xlu0 %544
        %546 = vrot.lane.b32.xlu0 %v306, 16
        %v547 = vpop.permute.xlu0 %546
        %548 = vrot.lane.b32.xlu0 %v308, 16
        %v549 = vpop.permute.xlu0 %548
        %550 = vrot.lane.b32.xlu0 %v311, 16
        %v551 = vpop.permute.xlu0 %550
        %552 = vrot.lane.b32.xlu0 %v313, 16
        %v553 = vpop.permute.xlu0 %552
        %554 = vrot.lane.b32.xlu0 %v316, 16
        %v555 = vpop.permute.xlu0 %554
        %556 = vrot.lane.b32.xlu0 %v318, 16
        %v557 = vpop.permute.xlu0 %556
        %558 = vrot.lane.b32.xlu0 %v365, 16
        %v559 = vpop.permute.xlu0 %558
        %560 = vrot.lane.b32.xlu0 %v367, 16
        %v561 = vpop.permute.xlu0 %560
        %578 = vrot.lane.b32.xlu0 %v327, 20
        %v579 = vpop.permute.xlu0 %578
        %580 = vrot.lane.b32.xlu0 %v329, 20
        %v581 = vpop.permute.xlu0 %580
        %582 = vrot.lane.b32.xlu0 %v332, 20
        %v583 = vpop.permute.xlu0 %582
        %584 = vrot.lane.b32.xlu0 %v334, 20
        %v585 = vpop.permute.xlu0 %584
        %586 = vrot.lane.b32.xlu0 %v337, 20
        %v587 = vpop.permute.xlu0 %586
        %588 = vrot.lane.b32.xlu0 %v339, 20
        %v589 = vpop.permute.xlu0 %588
        %590 = vrot.lane.b32.xlu0 %v342, 20
        %v591 = vpop.permute.xlu0 %590
        %592 = vrot.lane.b32.xlu0 %v344, 20
        %v593 = vpop.permute.xlu0 %592
        %594 = vrot.lane.b32.xlu0 %v347, 20
        %v595 = vpop.permute.xlu0 %594
        %596 = vrot.lane.b32.xlu0 %v349, 20
        %v597 = vpop.permute.xlu0 %596
        %598 = vrot.lane.b32.xlu0 %v352, 20
        %v599 = vpop.permute.xlu0 %598
        %600 = vrot.lane.b32.xlu0 %v354, 20
        %v601 = vpop.permute.xlu0 %600
        %602 = vrot.lane.b32.xlu0 %v357, 20
        %v603 = vpop.permute.xlu0 %602
        %604 = vrot.lane.b32.xlu0 %v359, 20
        %v605 = vpop.permute.xlu0 %604
        %606 = vrot.lane.b32.xlu0 %v370, 20
        %v607 = vpop.permute.xlu0 %606
        %608 = vrot.lane.b32.xlu0 %v372, 20
        %v609 = vpop.permute.xlu0 %608
        %626 = vrot.lane.b32.xlu0 %v230, 24
        %v627 = vpop.permute.xlu0 %626
        %628 = vrot.lane.b32.xlu0 %v231, 24
        %v629 = vpop.permute.xlu0 %628
        %630 = vrot.lane.b32.xlu0 %v233, 24
        %v631 = vpop.permute.xlu0 %630
        %632 = vrot.lane.b32.xlu0 %v234, 24
        %v633 = vpop.permute.xlu0 %632
        %634 = vrot.lane.b32.xlu0 %v236, 24
        %v635 = vpop.permute.xlu0 %634
        %636 = vrot.lane.b32.xlu0 %v237, 24
        %v637 = vpop.permute.xlu0 %636
        %638 = vrot.lane.b32.xlu0 %v239, 24
        %v639 = vpop.permute.xlu0 %638
        %640 = vrot.lane.b32.xlu0 %v240, 24
        %v641 = vpop.permute.xlu0 %640
        %642 = vrot.lane.b32.xlu0 %v242, 24
        %v643 = vpop.permute.xlu0 %642
        %644 = vrot.lane.b32.xlu0 %v243, 24
        %v645 = vpop.permute.xlu0 %644
        %646 = vrot.lane.b32.xlu0 %v245, 24
        %v647 = vpop.permute.xlu0 %646
        %648 = vrot.lane.b32.xlu0 %v246, 24
        %v649 = vpop.permute.xlu0 %648
        %650 = vrot.lane.b32.xlu0 %v248, 24
        %v651 = vpop.permute.xlu0 %650
        %652 = vrot.lane.b32.xlu0 %v249, 24
        %v653 = vpop.permute.xlu0 %652
        %654 = vrot.lane.b32.xlu0 %v251, 24
        %v655 = vpop.permute.xlu0 %654
        %656 = vrot.lane.b32.xlu0 %v252, 24
        %v657 = vpop.permute.xlu0 %656
        %674 = vrot.lane.b32.xlu0 %v291, 28
        %v675 = vpop.permute.xlu0 %674
        %676 = vrot.lane.b32.xlu0 %v293, 28
        %v677 = vpop.permute.xlu0 %676
        %678 = vrot.lane.b32.xlu0 %v296, 28
        %v679 = vpop.permute.xlu0 %678
        %680 = vrot.lane.b32.xlu0 %v298, 28
        %v681 = vpop.permute.xlu0 %680
        %682 = vrot.lane.b32.xlu0 %v301, 28
        %v683 = vpop.permute.xlu0 %682
        %684 = vrot.lane.b32.xlu0 %v303, 28
        %v685 = vpop.permute.xlu0 %684
        %686 = vrot.lane.b32.xlu0 %v306, 28
        %v687 = vpop.permute.xlu0 %686
        %688 = vrot.lane.b32.xlu0 %v308, 28
        %v689 = vpop.permute.xlu0 %688
        %690 = vrot.lane.b32.xlu0 %v311, 28
        %v691 = vpop.permute.xlu0 %690
        %692 = vrot.lane.b32.xlu0 %v313, 28
        %v693 = vpop.permute.xlu0 %692
        %694 = vrot.lane.b32.xlu0 %v316, 28
        %v695 = vpop.permute.xlu0 %694
        %696 = vrot.lane.b32.xlu0 %v318, 28
        %v697 = vpop.permute.xlu0 %696
        %698 = vrot.lane.b32.xlu0 %v365, 28
        %v699 = vpop.permute.xlu0 %698
        %700 = vrot.lane.b32.xlu0 %v367, 28
        %v701 = vpop.permute.xlu0 %700
        %702 = vrot.lane.b32.xlu0 %v378, 28
        %v703 = vpop.permute.xlu0 %702
        %704 = vrot.lane.b32.xlu0 %v380, 28
        %v705 = vpop.permute.xlu0 %704
        %722 = vrot.lane.b32.xlu0 %v332, 32
        %v723 = vpop.permute.xlu0 %722
        %724 = vrot.lane.b32.xlu0 %v334, 32
        %v725 = vpop.permute.xlu0 %724
        %726 = vrot.lane.b32.xlu0 %v337, 32
        %v727 = vpop.permute.xlu0 %726
        %728 = vrot.lane.b32.xlu0 %v339, 32
        %v729 = vpop.permute.xlu0 %728
        %730 = vrot.lane.b32.xlu0 %v342, 32
        %v731 = vpop.permute.xlu0 %730
        %732 = vrot.lane.b32.xlu0 %v344, 32
        %v733 = vpop.permute.xlu0 %732
        %734 = vrot.lane.b32.xlu0 %v347, 32
        %v735 = vpop.permute.xlu0 %734
        %736 = vrot.lane.b32.xlu0 %v349, 32
        %v737 = vpop.permute.xlu0 %736
        %738 = vrot.lane.b32.xlu0 %v352, 32
        %v739 = vpop.permute.xlu0 %738
        %740 = vrot.lane.b32.xlu0 %v354, 32
        %v741 = vpop.permute.xlu0 %740
        %742 = vrot.lane.b32.xlu0 %v357, 32
        %v743 = vpop.permute.xlu0 %742
        %744 = vrot.lane.b32.xlu0 %v359, 32
        %v745 = vpop.permute.xlu0 %744
        %746 = vrot.lane.b32.xlu0 %v370, 32
        %v747 = vpop.permute.xlu0 %746
        %748 = vrot.lane.b32.xlu0 %v372, 32
        %v749 = vpop.permute.xlu0 %748
        %750 = vrot.lane.b32.xlu0 %v383, 32
        %v751 = vpop.permute.xlu0 %750
        %752 = vrot.lane.b32.xlu0 %v385, 32
        %v753 = vpop.permute.xlu0 %752
        %vm770 = vcmask 31744
        %v771 = vsel %vm770, %v224, %v387
        %v772 = vsel %vm770, %v225, %v389
        %v773 = vsel %vm770, %v227, %v391
        %v774 = vsel %vm770, %v228, %v393
        %v775 = vsel %vm770, %v230, %v395
        %v776 = vsel %vm770, %v231, %v397
        %v777 = vsel %vm770, %v233, %v399
        %v778 = vsel %vm770, %v234, %v401
        %v779 = vsel %vm770, %v236, %v403
        %v780 = vsel %vm770, %v237, %v405
        %v781 = vsel %vm770, %v239, %v407
        %v782 = vsel %vm770, %v240, %v409
        %v783 = vsel %vm770, %v242, %v411
        %v784 = vsel %vm770, %v243, %v413
        %v785 = vsel %vm770, %v245, %v415
        %v786 = vsel %vm770, %v246, %v417
        %vm787 = vcmask 64512
        %v788 = vsel %vm787, %v771, %v435
        %v789 = vsel %vm787, %v772, %v437
        %v790 = vsel %vm787, %v773, %v439
        %v791 = vsel %vm787, %v774, %v441
        %v792 = vsel %vm787, %v775, %v443
        %v793 = vsel %vm787, %v776, %v445
        %v794 = vsel %vm787, %v777, %v447
        %v795 = vsel %vm787, %v778, %v449
        %v796 = vsel %vm787, %v779, %v451
        %v797 = vsel %vm787, %v780, %v453
        %v798 = vsel %vm787, %v781, %v455
        %v799 = vsel %vm787, %v782, %v457
        %v800 = vsel %vm787, %v783, %v459
        %v801 = vsel %vm787, %v784, %v461
        %v802 = vsel %vm787, %v785, %v463
        %v803 = vsel %vm787, %v786, %v465
        %vm804 = vcmask 97280
        %v805 = vsel %vm804, %v788, %v483
        %v806 = vsel %vm804, %v789, %v485
        %v807 = vsel %vm804, %v790, %v487
        %v808 = vsel %vm804, %v791, %v489
        %v809 = vsel %vm804, %v792, %v491
        %v810 = vsel %vm804, %v793, %v493
        %v811 = vsel %vm804, %v794, %v495
        %v812 = vsel %vm804, %v795, %v497
        %v813 = vsel %vm804, %v796, %v499
        %v814 = vsel %vm804, %v797, %v501
        %v815 = vsel %vm804, %v798, %v503
        %v816 = vsel %vm804, %v799, %v505
        %v817 = vsel %vm804, %v800, %v507
        %v818 = vsel %vm804, %v801, %v509
        %v819 = vsel %vm804, %v802, %v511
        %v820 = vsel %vm804, %v803, %v513
        %vm821 = vcmask 130048
        %v822 = vsel %vm821, %v805, %v531
        %v823 = vsel %vm821, %v806, %v533
        %v824 = vsel %vm821, %v807, %v535
        %v825 = vsel %vm821, %v808, %v537
        %v826 = vsel %vm821, %v809, %v539
        %v827 = vsel %vm821, %v810, %v541
        %v828 = vsel %vm821, %v811, %v543
        %v829 = vsel %vm821, %v812, %v545
        %v830 = vsel %vm821, %v813, %v547
        %v831 = vsel %vm821, %v814, %v549
        %v832 = vsel %vm821, %v815, %v551
        %v833 = vsel %vm821, %v816, %v553
        %v834 = vsel %vm821, %v817, %v555
        %v835 = vsel %vm821, %v818, %v557
        %v836 = vsel %vm821, %v819, %v559
        %v837 = vsel %vm821, %v820, %v561
        %vm838 = vcmask 162816
        %v839 = vsel %vm838, %v822, %v579
        %v840 = vsel %vm838, %v823, %v581
        %v841 = vsel %vm838, %v824, %v583
        %v842 = vsel %vm838, %v825, %v585
        %v843 = vsel %vm838, %v826, %v587
        %v844 = vsel %vm838, %v827, %v589
        %v845 = vsel %vm838, %v828, %v591
        %v846 = vsel %vm838, %v829, %v593
        %v847 = vsel %vm838, %v830, %v595
        %v848 = vsel %vm838, %v831, %v597
        %v849 = vsel %vm838, %v832, %v599
        %v850 = vsel %vm838, %v833, %v601
        %v851 = vsel %vm838, %v834, %v603
        %v852 = vsel %vm838, %v835, %v605
        %v853 = vsel %vm838, %v836, %v607
        %v854 = vsel %vm838, %v837, %v609
        %vm855 = vcmask 195584
        %v856 = vsel %vm855, %v839, %v627
        %v857 = vsel %vm855, %v840, %v629
        %v858 = vsel %vm855, %v841, %v631
        %v859 = vsel %vm855, %v842, %v633
        %v860 = vsel %vm855, %v843, %v635
        %v861 = vsel %vm855, %v844, %v637
        %v862 = vsel %vm855, %v845, %v639
        %v863 = vsel %vm855, %v846, %v641
        %v864 = vsel %vm855, %v847, %v643
        %v865 = vsel %vm855, %v848, %v645
        %v866 = vsel %vm855, %v849, %v647
        %v867 = vsel %vm855, %v850, %v649
        %v868 = vsel %vm855, %v851, %v651
        %v869 = vsel %vm855, %v852, %v653
        %v870 = vsel %vm855, %v853, %v655
        %v871 = vsel %vm855, %v854, %v657
        %vm872 = vcmask 228352
        %v873 = vsel %vm872, %v856, %v675
        %v874 = vsel %vm872, %v857, %v677
        %v875 = vsel %vm872, %v858, %v679
        %v876 = vsel %vm872, %v859, %v681
        %v877 = vsel %vm872, %v860, %v683
        %v878 = vsel %vm872, %v861, %v685
        %v879 = vsel %vm872, %v862, %v687
        %v880 = vsel %vm872, %v863, %v689
        %v881 = vsel %vm872, %v864, %v691
        %v882 = vsel %vm872, %v865, %v693
        %v883 = vsel %vm872, %v866, %v695
        %v884 = vsel %vm872, %v867, %v697
        %v885 = vsel %vm872, %v868, %v699
        %v886 = vsel %vm872, %v869, %v701
        %v887 = vsel %vm872, %v870, %v703
        %v888 = vsel %vm872, %v871, %v705
        %vm889 = vcmask 261120
        %v890 = vsel %vm889, %v873, %v723
        %v891 = vsel %vm889, %v874, %v725
        %v892 = vsel %vm889, %v875, %v727
        %v893 = vsel %vm889, %v876, %v729
        %v894 = vsel %vm889, %v877, %v731
        %v895 = vsel %vm889, %v878, %v733
        %v896 = vsel %vm889, %v879, %v735
        %v897 = vsel %vm889, %v880, %v737
        %v898 = vsel %vm889, %v881, %v739
        %v899 = vsel %vm889, %v882, %v741
        %v900 = vsel %vm889, %v883, %v743
        %v901 = vsel %vm889, %v884, %v745
        %v902 = vsel %vm889, %v885, %v747
        %v903 = vsel %vm889, %v886, %v749
        %v904 = vsel %vm889, %v887, %v751
        %v905 = vsel %vm889, %v888, %v753
        %v906 = vld [vmem:[%s1] sm:$0xff]
        %v907 = vld [vmem:[%s1 + $0x8] sm:$0xff]
        %v908 = vld [vmem:[%s1 + $0x10] sm:$0xff]
        %v909 = vld [vmem:[%s1 + $0x18] sm:$0xff]
        %v910 = vld [vmem:[%s1 + $0x20] sm:$0xf]
        %vm911 = vcmask 293888
        %v913 = vsel %vm911, %v890, 0
        %v916 = vsel %vm911, %v891, 0
        %v919 = vsel %vm911, %v892, 0
        %v922 = vsel %vm911, %v893, 0
        %v925 = vsel %vm911, %v894, 0
        %v928 = vsel %vm911, %v895, 0
        %v931 = vsel %vm911, %v896, 0
        %v934 = vsel %vm911, %v897, 0
        %v937 = vsel %vm911, %v898, 0
        %v940 = vsel %vm911, %v899, 0
        %v943 = vsel %vm911, %v900, 0
        %v946 = vsel %vm911, %v901, 0
        %v949 = vsel %vm911, %v902, 0
        %v952 = vsel %vm911, %v903, 0
        %v955 = vsel %vm911, %v904, 0
        %v958 = vsel %vm911, %v905, 0
        %vm960 = vcmask 1043456
        %v962 = vsel %vm960, %v910, 0
        %964 = vmatprep.subr.mxu0 0.0
        %965 = vmatpush1.msra.mxu0 %v906
        %966 = vmatprep.subr.mxu0 0.0
        %967 = vmatpush1.msra.mxu0 %v907
        %968 = vmatprep.subr.mxu0 0.0
        %969 = vmatpush1.msra.mxu0 %v908
        %970 = vmatprep.subr.mxu0 0.0
        %971 = vmatpush1.msra.mxu0 %v909
        %972 = vmatprep.subr.mxu0 0.0
        %973 = vmatpush1.msra.mxu0 %v962
        %974 = vmatprep.subr.mxu0 0.0
        %975 = vmatpush1.msra.mxu0 0.0
        %976 = vmatprep.subr.mxu0 0.0
        %977 = vmatpush1.msra.mxu0 0.0
        %978 = vmatprep.subr.mxu0 0.0
        %979 = vmatpush1.msra.mxu0 0.0
        %980 = vmatprep.subr.mxu0 0.0
        %981 = vmatpush1.msra.mxu0 0.0
        %982 = vmatprep.subr.mxu0 0.0
        %983 = vmatpush1.msra.mxu0 0.0
        %984 = vmatprep.subr.mxu0 0.0
        %985 = vmatpush1.msra.mxu0 0.0
        %986 = vmatprep.subr.mxu0 0.0
        %987 = vmatpush1.msra.mxu0 0.0
        %988 = vmatprep.subr.mxu0 0.0
        %989 = vmatpush1.msra.mxu0 0.0
        %990 = vmatprep.subr.mxu0 0.0
        %991 = vmatpush1.msra.mxu0 0.0
        %992 = vmatprep.subr.mxu0 0.0
        %993 = vmatpush1.msra.mxu0 0.0
        %994 = vmatprep.subr.mxu0 0.0
        %995 = vmatpush1.msra.mxu0 0.0
        %996 = vmatprep.subr.mxu0 0.0
        %997 = vmatpush1.msra.mxu0 0.0
        %998 = vmatprep.subr.mxu0 0.0
        %999 = vmatpush1.msra.mxu0 0.0
        %1000 = vmatprep.subr.mxu0 0.0
        %1001 = vmatpush1.msra.mxu0 0.0
        %1002 = vmatprep.subr.mxu0 0.0
        %1003 = vmatpush1.msra.mxu0 0.0
        %1004 = vmatprep.subr.mxu0 0.0
        %1005 = vmatpush1.msra.mxu0 0.0
        %1006 = vmatprep.subr.mxu0 0.0
        %1007 = vmatpush1.msra.mxu0 0.0
        %1008 = vmatprep.subr.mxu0 0.0
        %1009 = vmatpush1.msra.mxu0 0.0
        %1010 = vmatprep.subr.mxu0 0.0
        %1011 = vmatpush1.msra.mxu0 0.0
        %1012 = vmatprep.subr.mxu0 0.0
        %1013 = vmatpush1.msra.mxu0 0.0
        %1014 = vmatprep.subr.mxu0 0.0
        %1015 = vmatpush1.msra.mxu0 0.0
        %1016 = vmatprep.subr.mxu0 0.0
        %1017 = vmatpush1.msra.mxu0 0.0
        %1018 = vmatprep.subr.mxu0 0.0
        %1019 = vmatpush1.msra.mxu0 0.0
        %1020 = vmatprep.subr.mxu0 0.0
        %1021 = vmatpush1.msra.mxu0 0.0
        %1022 = vmatprep.subr.mxu0 0.0
        %1023 = vmatpush1.msra.mxu0 0.0
        %1024 = vmatprep.subr.mxu0 0.0
        %1025 = vmatpush1.msra.mxu0 0.0
        %1026 = vmatprep.subr.mxu0 0.0
        %1027 = vmatpush1.msra.mxu0 0.0
        %1028 = vmatprep.mubr.f32.mxu0 0.0
        %1029 = vmatmul.mubr.f32.gmra.mrb[0].mxu0 %v913
        %v1030 = vpop.f32.mrb[0].mxu0
        %v1031 = vadd.f32 0.0, %v1030
        %v1032 = vpop.f32.mrb[0].mxu0
        %1033 = vmatprep.mubr.f32.mxu0 0.0
        %1034 = vmatmul.mubr.f32.gmra.mrb[0].mxu0 %v916
        %v1035 = vpop.f32.mrb[0].mxu0
        %v1036 = vadd.f32 0.0, %v1035
        %v1037 = vpop.f32.mrb[0].mxu0
        %1038 = vmatprep.mubr.f32.mxu0 0.0
        %1039 = vmatmul.mubr.f32.gmra.mrb[0].mxu0 %v919
        %v1040 = vpop.f32.mrb[0].mxu0
        %v1041 = vadd.f32 0.0, %v1040
        %v1042 = vpop.f32.mrb[0].mxu0
        %1043 = vmatprep.mubr.f32.mxu0 0.0
        %1044 = vmatmul.mubr.f32.gmra.mrb[0].mxu0 %v922
        %v1045 = vpop.f32.mrb[0].mxu0
        %v1046 = vadd.f32 0.0, %v1045
        %v1047 = vpop.f32.mrb[0].mxu0
        %1048 = vmatprep.mubr.f32.mxu0 0.0
        %1049 = vmatmul.mubr.f32.gmra.mrb[0].mxu0 %v925
        %v1050 = vpop.f32.mrb[0].mxu0
        %v1051 = vadd.f32 0.0, %v1050
        %v1052 = vpop.f32.mrb[0].mxu0
        %1053 = vmatprep.mubr.f32.mxu0 0.0
        %1054 = vmatmul.mubr.f32.gmra.mrb[0].mxu0 %v928
        %v1055 = vpop.f32.mrb[0].mxu0
        %v1056 = vadd.f32 0.0, %v1055
        %v1057 = vpop.f32.mrb[0].mxu0
        %1058 = vmatprep.mubr.f32.mxu0 0.0
        %1059 = vmatmul.mubr.f32.gmra.mrb[0].mxu0 %v931
        %v1060 = vpop.f32.mrb[0].mxu0
        %v1061 = vadd.f32 0.0, %v1060
        %v1062 = vpop.f32.mrb[0].mxu0
        %1063 = vmatprep.mubr.f32.mxu0 0.0
        %1064 = vmatmul.mubr.f32.gmra.mrb[0].mxu0 %v934
        %v1065 = vpop.f32.mrb[0].mxu0
        %v1066 = vadd.f32 0.0, %v1065
        %v1067 = vpop.f32.mrb[0].mxu0
        %1068 = vmatprep.mubr.f32.mxu0 0.0
        %1069 = vmatmul.mubr.f32.gmra.mrb[0].mxu0 %v937
        %v1070 = vpop.f32.mrb[0].mxu0
        %v1071 = vadd.f32 0.0, %v1070
        %v1072 = vpop.f32.mrb[0].mxu0
        %1073 = vmatprep.mubr.f32.mxu0 0.0
        %1074 = vmatmul.mubr.f32.gmra.mrb[0].mxu0 %v940
        %v1075 = vpop.f32.mrb[0].mxu0
        %v1076 = vadd.f32 0.0, %v1075
        %v1077 = vpop.f32.mrb[0].mxu0
        %1078 = vmatprep.mubr.f32.mxu0 0.0
        %1079 = vmatmul.mubr.f32.gmra.mrb[0].mxu0 %v943
        %v1080 = vpop.f32.mrb[0].mxu0
        %v1081 = vadd.f32 0.0, %v1080
        %v1082 = vpop.f32.mrb[0].mxu0
        %1083 = vmatprep.mubr.f32.mxu0 0.0
        %1084 = vmatmul.mubr.f32.gmra.mrb[0].mxu0 %v946
        %v1085 = vpop.f32.mrb[0].mxu0
        %v1086 = vadd.f32 0.0, %v1085
        %v1087 = vpop.f32.mrb[0].mxu0
        %1088 = vmatprep.mubr.f32.mxu0 0.0
        %1089 = vmatmul.mubr.f32.gmra.mrb[0].mxu0 %v949
        %v1090 = vpop.f32.mrb[0].mxu0
        %v1091 = vadd.f32 0.0, %v1090
        %v1092 = vpop.f32.mrb[0].mxu0
        %1093 = vmatprep.mubr.f32.mxu0 0.0
        %1094 = vmatmul.mubr.f32.gmra.mrb[0].mxu0 %v952
        %v1095 = vpop.f32.mrb[0].mxu0
        %v1096 = vadd.f32 0.0, %v1095
        %v1097 = vpop.f32.mrb[0].mxu0
        %1098 = vmatprep.mubr.f32.mxu0 0.0
        %1099 = vmatmul.mubr.f32.gmra.mrb[0].mxu0 %v955
        %v1100 = vpop.f32.mrb[0].mxu0
        %v1101 = vadd.f32 0.0, %v1100
        %v1102 = vpop.f32.mrb[0].mxu0
        %1103 = vmatprep.mubr.f32.mxu0 0.0
        %1104 = vmatmul.mubr.f32.gmra.mrb[0].mxu0 %v958
        %v1105 = vpop.f32.mrb[0].mxu0
        %v1106 = vadd.f32 0.0, %v1105
        %v1107 = vpop.f32.mrb[0].mxu0
        %1108 = vdwg.mxu0
        %v1109 = vld [vmem:[%s2] sm:$0x1]
        %v1111 = vlaneseq
        %v1112 = vshrl.u32 %v1111, 7
        %v1113 = vsub.s32 0, %v1112
        %v1114 = vrot.slane %v1109, %v1113
        %v1116 = vmul.f32 %v1031, %v1114
        %v1117 = vmul.f32 %v1036, %v1114
        %v1118 = vmul.f32 %v1041, %v1114
        %v1119 = vmul.f32 %v1046, %v1114
        %v1120 = vmul.f32 %v1051, %v1114
        %v1121 = vmul.f32 %v1056, %v1114
        %v1122 = vmul.f32 %v1061, %v1114
        %v1123 = vmul.f32 %v1066, %v1114
        %v1124 = vmul.f32 %v1071, %v1114
        %v1125 = vmul.f32 %v1076, %v1114
        %v1126 = vmul.f32 %v1081, %v1114
        %v1127 = vmul.f32 %v1086, %v1114
        %v1128 = vmul.f32 %v1091, %v1114
        %v1129 = vmul.f32 %v1096, %v1114
        %v1130 = vmul.f32 %v1101, %v1114
        %v1131 = vmul.f32 %v1106, %v1114
        %v1132 = vld [vmem:[%s3] sm:$0x1]
        %v1134 = vlaneseq
        %v1135 = vshrl.u32 %v1134, 7
        %v1136 = vsub.s32 0, %v1135
        %v1137 = vrot.slane %v1132, %v1136
        %v1139 = vadd.f32 %v1116, %v1137
        %v1140 = vadd.f32 %v1117, %v1137
        %v1141 = vadd.f32 %v1118, %v1137
        %v1142 = vadd.f32 %v1119, %v1137
        %v1143 = vadd.f32 %v1120, %v1137
        %v1144 = vadd.f32 %v1121, %v1137
        %v1145 = vadd.f32 %v1122, %v1137
        %v1146 = vadd.f32 %v1123, %v1137
        %v1147 = vadd.f32 %v1124, %v1137
        %v1148 = vadd.f32 %v1125, %v1137
        %v1149 = vadd.f32 %v1126, %v1137
        %v1150 = vadd.f32 %v1127, %v1137
        %v1151 = vadd.f32 %v1128, %v1137
        %v1152 = vadd.f32 %v1129, %v1137
        %v1153 = vadd.f32 %v1130, %v1137
        %v1154 = vadd.f32 %v1131, %v1137
        %v1155 = vsub.f32 0.0, %v1139
        %v1156 = vsub.f32 0.0, %v1140
        %v1157 = vsub.f32 0.0, %v1141
        %v1158 = vsub.f32 0.0, %v1142
        %v1159 = vsub.f32 0.0, %v1143
        %v1160 = vsub.f32 0.0, %v1144
        %v1161 = vsub.f32 0.0, %v1145
        %v1162 = vsub.f32 0.0, %v1146
        %v1163 = vsub.f32 0.0, %v1147
        %v1164 = vsub.f32 0.0, %v1148
        %v1165 = vsub.f32 0.0, %v1149
        %v1166 = vsub.f32 0.0, %v1150
        %v1167 = vsub.f32 0.0, %v1151
        %v1168 = vsub.f32 0.0, %v1152
        %v1169 = vsub.f32 0.0, %v1153
        %v1170 = vsub.f32 0.0, %v1154
        %v1171 = vmul.f32 %v1155, 1.442695
        %v1172 = vpow.pop %v1171
        %v1173 = vmul.f32 %v1156, 1.442695
        %v1174 = vpow.pop %v1173
        %v1175 = vmul.f32 %v1157, 1.442695
        %v1176 = vpow.pop %v1175
        %v1177 = vmul.f32 %v1158, 1.442695
        %v1178 = vpow.pop %v1177
        %v1179 = vmul.f32 %v1159, 1.442695
        %v1180 = vpow.pop %v1179
        %v1181 = vmul.f32 %v1160, 1.442695
        %v1182 = vpow.pop %v1181
        %v1183 = vmul.f32 %v1161, 1.442695
        %v1184 = vpow.pop %v1183
        %v1185 = vmul.f32 %v1162, 1.442695
        %v1186 = vpow.pop %v1185
        %v1187 = vmul.f32 %v1163, 1.442695
        %v1188 = vpow.pop %v1187
        %v1189 = vmul.f32 %v1164, 1.442695
        %v1190 = vpow.pop %v1189
        %v1191 = vmul.f32 %v1165, 1.442695
        %v1192 = vpow.pop %v1191
        %v1193 = vmul.f32 %v1166, 1.442695
        %v1194 = vpow.pop %v1193
        %v1195 = vmul.f32 %v1167, 1.442695
        %v1196 = vpow.pop %v1195
        %v1197 = vmul.f32 %v1168, 1.442695
        %v1198 = vpow.pop %v1197
        %v1199 = vmul.f32 %v1169, 1.442695
        %v1200 = vpow.pop %v1199
        %v1201 = vmul.f32 %v1170, 1.442695
        %v1202 = vpow.pop %v1201
        %v1203 = vadd.f32 %v1172, 1.0
        %v1204 = vadd.f32 %v1174, 1.0
        %v1205 = vadd.f32 %v1176, 1.0
        %v1206 = vadd.f32 %v1178, 1.0
        %v1207 = vadd.f32 %v1180, 1.0
        %v1208 = vadd.f32 %v1182, 1.0
        %v1209 = vadd.f32 %v1184, 1.0
        %v1210 = vadd.f32 %v1186, 1.0
        %v1211 = vadd.f32 %v1188, 1.0
        %v1212 = vadd.f32 %v1190, 1.0
        %v1213 = vadd.f32 %v1192, 1.0
        %v1214 = vadd.f32 %v1194, 1.0
        %v1215 = vadd.f32 %v1196, 1.0
        %v1216 = vadd.f32 %v1198, 1.0
        %v1217 = vadd.f32 %v1200, 1.0
        %v1218 = vadd.f32 %v1202, 1.0
        %v1219 = vrcp.pop %v1203
        %v1220 = vrcp.pop %v1204
        %v1221 = vrcp.pop %v1205
        %v1222 = vrcp.pop %v1206
        %v1223 = vrcp.pop %v1207
        %v1224 = vrcp.pop %v1208
        %v1225 = vrcp.pop %v1209
        %v1226 = vrcp.pop %v1210
        %v1227 = vrcp.pop %v1211
        %v1228 = vrcp.pop %v1212
        %v1229 = vrcp.pop %v1213
        %v1230 = vrcp.pop %v1214
        %v1231 = vrcp.pop %v1215
        %v1232 = vrcp.pop %v1216
        %v1233 = vrcp.pop %v1217
        %v1234 = vrcp.pop %v1218
        %v1235 = vmul.f32 %v1139, %v1219
        %v1236 = vmul.f32 %v1140, %v1220
        %v1237 = vmul.f32 %v1141, %v1221
        %v1238 = vmul.f32 %v1142, %v1222
        %v1239 = vmul.f32 %v1143, %v1223
        %v1240 = vmul.f32 %v1144, %v1224
        %v1241 = vmul.f32 %v1145, %v1225
        %v1242 = vmul.f32 %v1146, %v1226
        %v1243 = vmul.f32 %v1147, %v1227
        %v1244 = vmul.f32 %v1148, %v1228
        %v1245 = vmul.f32 %v1149, %v1229
        %v1246 = vmul.f32 %v1150, %v1230
        %v1247 = vmul.f32 %v1151, %v1231
        %v1248 = vmul.f32 %v1152, %v1232
        %v1249 = vmul.f32 %v1153, %v1233
        %v1250 = vmul.f32 %v1154, %v1234
        %1251 = vst [vmem:[%s214] sm:$0xff] %v1235
        %1252 = vst [vmem:[%s214 + $0x8] sm:$0xff] %v1236
        %1253 = vst [vmem:[%s214 + $0x10] sm:$0xff] %v1237
        %1254 = vst [vmem:[%s214 + $0x18] sm:$0xff] %v1238
        %1255 = vst [vmem:[%s214 + $0x20] sm:$0xff] %v1239
        %1256 = vst [vmem:[%s214 + $0x28] sm:$0xff] %v1240
        %1257 = vst [vmem:[%s214 + $0x30] sm:$0xff] %v1241
        %1258 = vst [vmem:[%s214 + $0x38] sm:$0xff] %v1242
        %1259 = vst [vmem:[%s214 + $0x40] sm:$0xff] %v1243
        %1260 = vst [vmem:[%s214 + $0x48] sm:$0xff] %v1244
        %1261 = vst [vmem:[%s214 + $0x50] sm:$0xff] %v1245
        %1262 = vst [vmem:[%s214 + $0x58] sm:$0xff] %v1246
        %1263 = vst [vmem:[%s214 + $0x60] sm:$0xff] %v1247
        %1264 = vst [vmem:[%s214 + $0x68] sm:$0xff] %v1248
        %1265 = vst [vmem:[%s214 + $0x70] sm:$0xff] %v1249
        %1266 = vst [vmem:[%s214 + $0x78] sm:$0xff] %v1250
        %s1267 = sand.u32 %s131, 1
        %s1268 = scalar_lea.sflag [#allocation3], %s1267
        %s1269 = sand.u32 %s131, 1
        %s1270 = smul.addr %s1269, 128
        %s1271 = scalar_lea.vmem [#allocation2], %s1270
        // Predicated region
        $region37: #{tpu_custom_call.1} parent=35 // pred_check
          %p1272 = pneg %p141
        $region38: #{tpu_custom_call.1} parent=35 // pred_check_branch
          %1274 = sbr.rel (%p1272) target = $region40
        $region39: #{tpu_custom_call.1} parent=35 // pred_region
          %s1276 = ssub.s32 2048, 2048
          %1277 = vsyncadd %s1268, %s1276
          %s1278 = smul.addr %s23, 16
          %s1279 = smul.addr %s22, 32
          %s1280 = sadd.s32 %s1278, %s1279
          %s1281 = smul.addr %s1280, 128
          %s1282 = scalar_lea.hbm %s4, %s1281
          %s1283 = sshll.u32 %s1271, 4
          %s1284 = int_to_ptr.vmem [resolvable:$true] %s1283
          %1289 = dma.vmem_to_hbm [thread:$0]  %s1284, 2048, %s1282, %s1268, 128, 128, 8
        $region40: #{tpu_custom_call.1} parent=35 // pred_fallthru
          _
      $region36: #{tpu_custom_call.1} parent=5 // pred_fallthru
        _
      %p1290 = scmp.le.s32.totalorder 2, %s13
      // Predicated region
      $region41: #{tpu_custom_call.1} parent=5 // pred_check
        %p1291 = pneg %p1290
      $region42: #{tpu_custom_call.1} parent=5 // pred_check_branch
        %1293 = sbr.rel (%p1291) target = $region44
      $region43: #{tpu_custom_call.1} parent=5 // pred_region
        %s1294 = ssub.s32 %s13, 2
        // Predicated region
        $region45: #{tpu_custom_call.1} parent=43 // pred_check
          %p1295 = pneg %p147
        $region46: #{tpu_custom_call.1} parent=43 // pred_check_branch
          %1297 = sbr.rel (%p1295) target = $region48
        $region47: #{tpu_custom_call.1} parent=43 // pred_region
          %s1298 = sand.u32 %s132, 1
          %s1299 = scalar_lea.sflag [#allocation3], %s1298
          %s1300 = sand.u32 %s132, 1
          %s1301 = smul.addr %s1300, 128
          %s1302 = scalar_lea.vmem [#allocation2], %s1301
          %1303 = dma.done %s1299, 2048
        $region48: #{tpu_custom_call.1} parent=43 // pred_fallthru
          _
      $region44: #{tpu_custom_call.1} parent=5 // pred_fallthru
        _
    $region6: #{tpu_custom_call.1} parent=1 // loop_footer
      %s17 = sadd.s32 1, %s13
    $region7: #{tpu_custom_call.1} parent=1 // loop_footer_branch
      %12 = sbr.rel target = $region3
    $region8: #{tpu_custom_call.1} parent=1 // loop_exit
      _
    %1304 = vsyncpa [#allocation3], 1
    %s1305 = scalar_lea.sflag [#allocation3], 1
    %1306 = vsyncpa %s1305, 1

</llo_original>
